<compile_context>
chip_gen: v5e
topology: v5e:2x2
jax: 0.10.0
libtpu: 0.0.40
codegen_flags: <defaults>
</compile_context>

<pallas_src>
import jax
import jax.numpy as jnp
from jax.experimental import pallas as pl

# ----------------------------- hyper-params (small demo sizes) ---------------
HIDDEN_SIZE = 32
INPUT_SIZE = 26
NUM_CLASSES = 35
NUM_LAYERS = 2
SEQ_LEN = 8
BATCH = 2


# ----------------------------- fused Pallas kernel ---------------------------
def _fused_lstm_fc_kernel(x_ref, w1i_ref, b1_ref, wblk_ref, b2_ref,
                          fcw_ref, fcb_ref, out_ref):
    """Whole forward: skew-fused 2-layer LSTM (static unrolled) + fc head."""
    B, T, _ = x_ref.shape
    H4 = b1_ref.shape[1]          # 4H
    H = H4 // 4

    # ---- prologue: layer-1 input projection for the whole sequence --------
    # (off the recurrent critical path; bias b_ih1 + b_hh1 folded in)
    w1i = w1i_ref[...]            # (D, 4H)
    b1 = b1_ref[...]              # (1, 4H)
    xp_bt = [jnp.dot(x_ref[b], w1i, preferred_element_type=jnp.float32) + b1
             for b in range(B)]                                   # B x (T, 4H)
    # Re-stitch to per-timestep (B, 4H) tiles via static slices.
    xp = [jnp.concatenate([xp_bt[b][t:t + 1, :] for b in range(B)], axis=0)
          for t in range(T)]                                      # T x (B, 4H)

    wblk = wblk_ref[...]          # (2H, 8H), loop-invariant MXU RHS
    b2 = b2_ref[...]              # (1, 4H)  (b_ih2 + b_hh2)

    def cell(gates, c):
        # PyTorch gate order [i, f, g, o]; two full-tile EUP passes.
        sig = jax.nn.sigmoid(gates)
        tnh = jnp.tanh(gates)
        i_g = sig[:, 0 * H:1 * H]
        f_g = sig[:, 1 * H:2 * H]
        g_g = tnh[:, 2 * H:3 * H]
        o_g = sig[:, 3 * H:4 * H]
        c_new = f_g * c + i_g * g_g
        h_new = o_g * jnp.tanh(c_new)
        return h_new, c_new

    zeros_bh = jnp.zeros((B, H), jnp.float32)
    h1, c1 = zeros_bh, zeros_bh
    h2, c2 = zeros_bh, zeros_bh
    outs = [None] * T

    # Skew step s = 0: both hidden states are zero, so the recurrent matmul is
    # identically zero -> layer-1 gates are just xp[0].
    h1, c1 = cell(xp[0], c1)

    # Skew steps s = 1..T: ONE (B,2H)@(2H,8H) matmul yields layer-1's recurrent
    # term (step s) in lanes [:4H] and layer-2's input+recurrent term
    # (step s-1) in lanes [4H:].
    for s in range(1, T + 1):
        lhs = jnp.concatenate([h1, h2], axis=1)                   # (B, 2H)
        rec = jnp.dot(lhs, wblk, preferred_element_type=jnp.float32)  # (B, 8H)
        if s < T:
            h1, c1 = cell(xp[s] + rec[:, :H4], c1)                # layer-1, t=s
        h2, c2 = cell(rec[:, H4:] + b2, c2)                       # layer-2, t=s-1
        outs[s - 1] = h2

    # ---- fc head: lane-dense (B, T*H) slab, exactly out.reshape(B, -1) ----
    flat = jnp.concatenate(outs, axis=1)                          # (B, T*H)
    out_ref[...] = jnp.dot(flat, fcw_ref[...],
                           preferred_element_type=jnp.float32) + fcb_ref[...]


# ----------------------------- wrappers ---------------------------------------
def pack_params(params):
    """Pre-pack weights once (outside the jitted forward).

    Builds the block recurrent matrix used by the skew-fused kernel:
        W_blk = [[W1_hh^T, W2_ih^T],
                 [   0   , W2_hh^T]]   shape (2H, 8H)
    and folds each layer's two biases into one row vector.
    """
    (w_ih1, w_hh1, b_ih1, b_hh1), (w_ih2, w_hh2, b_ih2, b_hh2) = params["lstm"]
    H = w_hh1.shape[1]
    top = jnp.concatenate([jnp.transpose(w_hh1), jnp.transpose(w_ih2)], axis=1)
    bot = jnp.concatenate([jnp.zeros((H, 4 * H), jnp.float32),
                           jnp.transpose(w_hh2)], axis=1)
    return {
        "w1i_t": jnp.transpose(w_ih1),                 # (D, 4H)
        "b1": (b_ih1 + b_hh1).reshape(1, -1),          # (1, 4H)
        "w_blk": jnp.concatenate([top, bot], axis=0),  # (2H, 8H)
        "b2": (b_ih2 + b_hh2).reshape(1, -1),          # (1, 4H)
        "fc_w_t": jnp.transpose(params["fc_w"]),       # (T*H, C)
        "fc_b": params["fc_b"].reshape(1, -1),         # (1, C)
    }


def lstm_forward_pallas(x, packed):
    B, T, D = x.shape
    H = packed["w_blk"].shape[0] // 2
    C = packed["fc_w_t"].shape[1]

    cost = pl.CostEstimate(flops=700_000, transcendentals=9_000,
                           bytes_accessed=118_000)

    return pl.pallas_call(
        _fused_lstm_fc_kernel,
        out_shape=jax.ShapeDtypeStruct((B, C), jnp.float32),
        in_specs=[
            pl.BlockSpec((B, T, D), lambda: (0, 0, 0)),        # x (natural layout)
            pl.BlockSpec((D, 4 * H), lambda: (0, 0)),          # W1_ih^T
            pl.BlockSpec((1, 4 * H), lambda: (0, 0)),          # b1 (= b_ih1+b_hh1)
            pl.BlockSpec((2 * H, 8 * H), lambda: (0, 0)),      # W_blk
            pl.BlockSpec((1, 4 * H), lambda: (0, 0)),          # b2 (= b_ih2+b_hh2)
            pl.BlockSpec((T * H, C), lambda: (0, 0)),          # fc_w^T
            pl.BlockSpec((1, C), lambda: (0, 0)),              # fc_b
        ],
        out_specs=pl.BlockSpec((B, C), lambda: (0, 0)),
        cost_estimate=cost,
    )(x, packed["w1i_t"], packed["b1"], packed["w_blk"], packed["b2"],
      packed["fc_w_t"], packed["fc_b"])


@jax.jit
def lstm_model_forward(x, l, packed):
    """Equivalent of LSTM.forward(x, l).  `l` is unused, exactly like PyTorch."""
    del l
    return lstm_forward_pallas(x, packed)


# ----------------------------- reference (pure JAX) ----------------------------
def _ref_forward(x, params):
    B, T, _ = x.shape
    h_seq = x
    for (w_ih, w_hh, b_ih, b_hh) in params["lstm"]:
        H = w_hh.shape[1]
        h = jnp.zeros((B, H), jnp.float32)
        c = jnp.zeros((B, H), jnp.float32)

        def step(carry, x_t):
            h, c = carry
            g = x_t @ w_ih.T + h @ w_hh.T + b_ih + b_hh
            i = jax.nn.sigmoid(g[:, 0 * H:1 * H])
            f = jax.nn.sigmoid(g[:, 1 * H:2 * H])
            gg = jnp.tanh(g[:, 2 * H:3 * H])
            o = jax.nn.sigmoid(g[:, 3 * H:4 * H])
            c = f * c + i * gg
            h = o * jnp.tanh(c)
            return (h, c), h

        (_, _), outs = jax.lax.scan(step, (h, c), jnp.transpose(h_seq, (1, 0, 2)))
        h_seq = jnp.transpose(outs, (1, 0, 2))
    flat = h_seq.reshape(B, -1)
    return flat @ params["fc_w"].T + params["fc_b"]


# ----------------------------- param init --------------------------------------
def init_params(key):
    k = 1.0 / jnp.sqrt(HIDDEN_SIZE)
    params = {"lstm": []}
    layers_in = [INPUT_SIZE] + [HIDDEN_SIZE] * (NUM_LAYERS - 1)
    for din in layers_in:
        key, k1, k2, k3, k4 = jax.random.split(key, 5)
        w_ih = jax.random.uniform(k1, (4 * HIDDEN_SIZE, din), jnp.float32, -k, k)
        w_hh = jax.random.uniform(k2, (4 * HIDDEN_SIZE, HIDDEN_SIZE), jnp.float32, -k, k)
        b_ih = jax.random.uniform(k3, (4 * HIDDEN_SIZE,), jnp.float32, -k, k)
        b_hh = jax.random.uniform(k4, (4 * HIDDEN_SIZE,), jnp.float32, -k, k)
        params["lstm"].append((w_ih, w_hh, b_ih, b_hh))
    key, k5, k6 = jax.random.split(key, 3)
    fan_in = HIDDEN_SIZE * SEQ_LEN
    kf = 1.0 / jnp.sqrt(fan_in)
    params["fc_w"] = jax.random.uniform(k5, (NUM_CLASSES, fan_in), jnp.float32, -kf, kf)
    params["fc_b"] = jax.random.uniform(k6, (NUM_CLASSES,), jnp.float32, -kf, kf)
    return params


# ----------------------------- main ---------------------------------------------
if __name__ == "__main__":
    key = jax.random.PRNGKey(0)
    key, kx = jax.random.split(key)
    x = jax.random.normal(kx, (BATCH, SEQ_LEN, INPUT_SIZE), jnp.float32)
    l = jnp.full((BATCH,), SEQ_LEN, jnp.int32)   # unused, matches forward(x, l)
    params = init_params(key)
    packed = pack_params(params)                 # weight prep hoisted out of forward

    out = lstm_model_forward(x, l, packed)
    out = jax.block_until_ready(out)

    ref = _ref_forward(x, params)
    assert out.shape == (BATCH, NUM_CLASSES)
    assert jnp.allclose(out, ref, atol=1e-4, rtol=1e-4), "mismatch vs reference"

    print("KERNEL_OK")
</pallas_src>

<mosaic_0001>
module attributes {stable_mosaic.version = 11 : i64} {
  func.func @_fused_lstm_fc_kernel(%arg0: memref<2x8x26xf32, #tpu.memory_space<vmem>>, %arg1: memref<26x128xf32, #tpu.memory_space<vmem>>, %arg2: memref<1x128xf32, #tpu.memory_space<vmem>>, %arg3: memref<64x256xf32, #tpu.memory_space<vmem>>, %arg4: memref<1x128xf32, #tpu.memory_space<vmem>>, %arg5: memref<256x35xf32, #tpu.memory_space<vmem>>, %arg6: memref<1x35xf32, #tpu.memory_space<vmem>>, %arg7: memref<2x35xf32, #tpu.memory_space<vmem>>) attributes {dimension_semantics = [], scalar_prefetch = 0 : i64, scratch_operands = 0 : i64, tpu.core_type = #tpu.core_type<tc>} {
    %c0 = arith.constant 0 : index
    %c0_0 = arith.constant 0 : index
    %0 = vector.load %arg1[%c0, %c0_0] : memref<26x128xf32, #tpu.memory_space<vmem>>, vector<26x128xf32>
    %c0_1 = arith.constant 0 : index
    %c0_2 = arith.constant 0 : index
    %1 = vector.load %arg2[%c0_1, %c0_2] : memref<1x128xf32, #tpu.memory_space<vmem>>, vector<1x128xf32>
    %c0_3 = arith.constant 0 : index
    %c0_4 = arith.constant 0 : index
    %c0_5 = arith.constant 0 : index
    %2 = vector.load %arg0[%c0_3, %c0_4, %c0_5] : memref<2x8x26xf32, #tpu.memory_space<vmem>>, vector<1x8x26xf32>
    %3 = vector.shape_cast %2 : vector<1x8x26xf32> to vector<8x26xf32>
    %cst = arith.constant dense<0.000000e+00> : vector<8x128xf32>
    %4 = tpu.matmul %3, %0, %cst {dimension_numbers = #tpu.dot_dimension_numbers<[1], [0], [0], [1], [0, 0, 1, 1], [], []>} : vector<8x26xf32>, vector<26x128xf32>, vector<8x128xf32> -> vector<8x128xf32>
    %5 = vector.broadcast %1 : vector<1x128xf32> to vector<8x128xf32>
    %6 = arith.addf %4, %5 : vector<8x128xf32>
    %c1 = arith.constant 1 : index
    %c0_6 = arith.constant 0 : index
    %c0_7 = arith.constant 0 : index
    %7 = vector.load %arg0[%c1, %c0_6, %c0_7] : memref<2x8x26xf32, #tpu.memory_space<vmem>>, vector<1x8x26xf32>
    %8 = vector.shape_cast %7 : vector<1x8x26xf32> to vector<8x26xf32>
    %cst_8 = arith.constant dense<0.000000e+00> : vector<8x128xf32>
    %9 = tpu.matmul %8, %0, %cst_8 {dimension_numbers = #tpu.dot_dimension_numbers<[1], [0], [0], [1], [0, 0, 1, 1], [], []>} : vector<8x26xf32>, vector<26x128xf32>, vector<8x128xf32> -> vector<8x128xf32>
    %10 = vector.broadcast %1 : vector<1x128xf32> to vector<8x128xf32>
    %11 = arith.addf %9, %10 : vector<8x128xf32>
    %12 = vector.extract_strided_slice %6 {offsets = [0, 0], sizes = [1, 128], strides = [1, 1]} : vector<8x128xf32> to vector<1x128xf32>
    %13 = vector.extract_strided_slice %11 {offsets = [0, 0], sizes = [1, 128], strides = [1, 1]} : vector<8x128xf32> to vector<1x128xf32>
    %14 = tpu.concatenate %12, %13 in 0 : vector<1x128xf32>, vector<1x128xf32> -> vector<2x128xf32>
    %15 = vector.extract_strided_slice %6 {offsets = [1, 0], sizes = [1, 128], strides = [1, 1]} : vector<8x128xf32> to vector<1x128xf32>
    %16 = vector.extract_strided_slice %11 {offsets = [1, 0], sizes = [1, 128], strides = [1, 1]} : vector<8x128xf32> to vector<1x128xf32>
    %17 = tpu.concatenate %15, %16 in 0 : vector<1x128xf32>, vector<1x128xf32> -> vector<2x128xf32>
    %18 = vector.extract_strided_slice %6 {offsets = [2, 0], sizes = [1, 128], strides = [1, 1]} : vector<8x128xf32> to vector<1x128xf32>
    %19 = vector.extract_strided_slice %11 {offsets = [2, 0], sizes = [1, 128], strides = [1, 1]} : vector<8x128xf32> to vector<1x128xf32>
    %20 = tpu.concatenate %18, %19 in 0 : vector<1x128xf32>, vector<1x128xf32> -> vector<2x128xf32>
    %21 = vector.extract_strided_slice %6 {offsets = [3, 0], sizes = [1, 128], strides = [1, 1]} : vector<8x128xf32> to vector<1x128xf32>
    %22 = vector.extract_strided_slice %11 {offsets = [3, 0], sizes = [1, 128], strides = [1, 1]} : vector<8x128xf32> to vector<1x128xf32>
    %23 = tpu.concatenate %21, %22 in 0 : vector<1x128xf32>, vector<1x128xf32> -> vector<2x128xf32>
    %24 = vector.extract_strided_slice %6 {offsets = [4, 0], sizes = [1, 128], strides = [1, 1]} : vector<8x128xf32> to vector<1x128xf32>
    %25 = vector.extract_strided_slice %11 {offsets = [4, 0], sizes = [1, 128], strides = [1, 1]} : vector<8x128xf32> to vector<1x128xf32>
    %26 = tpu.concatenate %24, %25 in 0 : vector<1x128xf32>, vector<1x128xf32> -> vector<2x128xf32>
    %27 = vector.extract_strided_slice %6 {offsets = [5, 0], sizes = [1, 128], strides = [1, 1]} : vector<8x128xf32> to vector<1x128xf32>
    %28 = vector.extract_strided_slice %11 {offsets = [5, 0], sizes = [1, 128], strides = [1, 1]} : vector<8x128xf32> to vector<1x128xf32>
    %29 = tpu.concatenate %27, %28 in 0 : vector<1x128xf32>, vector<1x128xf32> -> vector<2x128xf32>
    %30 = vector.extract_strided_slice %6 {offsets = [6, 0], sizes = [1, 128], strides = [1, 1]} : vector<8x128xf32> to vector<1x128xf32>
    %31 = vector.extract_strided_slice %11 {offsets = [6, 0], sizes = [1, 128], strides = [1, 1]} : vector<8x128xf32> to vector<1x128xf32>
    %32 = tpu.concatenate %30, %31 in 0 : vector<1x128xf32>, vector<1x128xf32> -> vector<2x128xf32>
    %33 = vector.extract_strided_slice %6 {offsets = [7, 0], sizes = [1, 128], strides = [1, 1]} : vector<8x128xf32> to vector<1x128xf32>
    %34 = vector.extract_strided_slice %11 {offsets = [7, 0], sizes = [1, 128], strides = [1, 1]} : vector<8x128xf32> to vector<1x128xf32>
    %35 = tpu.concatenate %33, %34 in 0 : vector<1x128xf32>, vector<1x128xf32> -> vector<2x128xf32>
    %c0_9 = arith.constant 0 : index
    %c0_10 = arith.constant 0 : index
    %36 = vector.load %arg3[%c0_9, %c0_10] : memref<64x256xf32, #tpu.memory_space<vmem>>, vector<64x256xf32>
    %c0_11 = arith.constant 0 : index
    %c0_12 = arith.constant 0 : index
    %37 = vector.load %arg4[%c0_11, %c0_12] : memref<1x128xf32, #tpu.memory_space<vmem>>, vector<1x128xf32>
    %cst_13 = arith.constant 0.000000e+00 : f32
    %38 = vector.broadcast %cst_13 : f32 to vector<2x32xf32>
    %39 = arith.negf %14 : vector<2x128xf32>
    %40 = math.exp %39 : vector<2x128xf32>
    %cst_14 = arith.constant 1.000000e+00 : f32
    %41 = vector.broadcast %cst_14 : f32 to vector<2x128xf32>
    %42 = arith.addf %41, %40 : vector<2x128xf32>
    %43 = arith.divf %41, %42 : vector<2x128xf32>
    %44 = math.tanh %14 : vector<2x128xf32>
    %45 = vector.extract_strided_slice %43 {offsets = [0, 0], sizes = [2, 32], strides = [1, 1]} : vector<2x128xf32> to vector<2x32xf32>
    %46 = vector.extract_strided_slice %43 {offsets = [0, 32], sizes = [2, 32], strides = [1, 1]} : vector<2x128xf32> to vector<2x32xf32>
    %47 = vector.extract_strided_slice %44 {offsets = [0, 64], sizes = [2, 32], strides = [1, 1]} : vector<2x128xf32> to vector<2x32xf32>
    %48 = vector.extract_strided_slice %43 {offsets = [0, 96], sizes = [2, 32], strides = [1, 1]} : vector<2x128xf32> to vector<2x32xf32>
    %49 = arith.mulf %46, %38 : vector<2x32xf32>
    %50 = arith.mulf %45, %47 : vector<2x32xf32>
    %51 = arith.addf %49, %50 : vector<2x32xf32>
    %52 = math.tanh %51 : vector<2x32xf32>
    %53 = arith.mulf %48, %52 : vector<2x32xf32>
    %54 = tpu.concatenate %53, %38 in 1 : vector<2x32xf32>, vector<2x32xf32> -> vector<2x64xf32>
    %cst_15 = arith.constant dense<0.000000e+00> : vector<2x256xf32>
    %55 = tpu.matmul %54, %36, %cst_15 {dimension_numbers = #tpu.dot_dimension_numbers<[1], [0], [0], [1], [0, 0, 1, 1], [], []>} : vector<2x64xf32>, vector<64x256xf32>, vector<2x256xf32> -> vector<2x256xf32>
    %56 = vector.extract_strided_slice %55 {offsets = [0, 0], sizes = [2, 128], strides = [1, 1]} : vector<2x256xf32> to vector<2x128xf32>
    %57 = arith.addf %17, %56 : vector<2x128xf32>
    %58 = arith.negf %57 : vector<2x128xf32>
    %59 = math.exp %58 : vector<2x128xf32>
    %cst_16 = arith.constant 1.000000e+00 : f32
    %60 = vector.broadcast %cst_16 : f32 to vector<2x128xf32>
    %61 = arith.addf %60, %59 : vector<2x128xf32>
    %62 = arith.divf %60, %61 : vector<2x128xf32>
    %63 = math.tanh %57 : vector<2x128xf32>
    %64 = vector.extract_strided_slice %62 {offsets = [0, 0], sizes = [2, 32], strides = [1, 1]} : vector<2x128xf32> to vector<2x32xf32>
    %65 = vector.extract_strided_slice %62 {offsets = [0, 32], sizes = [2, 32], strides = [1, 1]} : vector<2x128xf32> to vector<2x32xf32>
    %66 = vector.extract_strided_slice %63 {offsets = [0, 64], sizes = [2, 32], strides = [1, 1]} : vector<2x128xf32> to vector<2x32xf32>
    %67 = vector.extract_strided_slice %62 {offsets = [0, 96], sizes = [2, 32], strides = [1, 1]} : vector<2x128xf32> to vector<2x32xf32>
    %68 = arith.mulf %65, %51 : vector<2x32xf32>
    %69 = arith.mulf %64, %66 : vector<2x32xf32>
    %70 = arith.addf %68, %69 : vector<2x32xf32>
    %71 = math.tanh %70 : vector<2x32xf32>
    %72 = arith.mulf %67, %71 : vector<2x32xf32>
    %73 = vector.extract_strided_slice %55 {offsets = [0, 128], sizes = [2, 128], strides = [1, 1]} : vector<2x256xf32> to vector<2x128xf32>
    %74 = vector.broadcast %37 : vector<1x128xf32> to vector<2x128xf32>
    %75 = arith.addf %73, %74 : vector<2x128xf32>
    %76 = arith.negf %75 : vector<2x128xf32>
    %77 = math.exp %76 : vector<2x128xf32>
    %cst_17 = arith.constant 1.000000e+00 : f32
    %78 = vector.broadcast %cst_17 : f32 to vector<2x128xf32>
    %79 = arith.addf %78, %77 : vector<2x128xf32>
    %80 = arith.divf %78, %79 : vector<2x128xf32>
    %81 = math.tanh %75 : vector<2x128xf32>
    %82 = vector.extract_strided_slice %80 {offsets = [0, 0], sizes = [2, 32], strides = [1, 1]} : vector<2x128xf32> to vector<2x32xf32>
    %83 = vector.extract_strided_slice %80 {offsets = [0, 32], sizes = [2, 32], strides = [1, 1]} : vector<2x128xf32> to vector<2x32xf32>
    %84 = vector.extract_strided_slice %81 {offsets = [0, 64], sizes = [2, 32], strides = [1, 1]} : vector<2x128xf32> to vector<2x32xf32>
    %85 = vector.extract_strided_slice %80 {offsets = [0, 96], sizes = [2, 32], strides = [1, 1]} : vector<2x128xf32> to vector<2x32xf32>
    %86 = arith.mulf %83, %38 : vector<2x32xf32>
    %87 = arith.mulf %82, %84 : vector<2x32xf32>
    %88 = arith.addf %86, %87 : vector<2x32xf32>
    %89 = math.tanh %88 : vector<2x32xf32>
    %90 = arith.mulf %85, %89 : vector<2x32xf32>
    %91 = tpu.concatenate %72, %90 in 1 : vector<2x32xf32>, vector<2x32xf32> -> vector<2x64xf32>
    %cst_18 = arith.constant dense<0.000000e+00> : vector<2x256xf32>
    %92 = tpu.matmul %91, %36, %cst_18 {dimension_numbers = #tpu.dot_dimension_numbers<[1], [0], [0], [1], [0, 0, 1, 1], [], []>} : vector<2x64xf32>, vector<64x256xf32>, vector<2x256xf32> -> vector<2x256xf32>
    %93 = vector.extract_strided_slice %92 {offsets = [0, 0], sizes = [2, 128], strides = [1, 1]} : vector<2x256xf32> to vector<2x128xf32>
    %94 = arith.addf %20, %93 : vector<2x128xf32>
    %95 = arith.negf %94 : vector<2x128xf32>
    %96 = math.exp %95 : vector<2x128xf32>
    %cst_19 = arith.constant 1.000000e+00 : f32
    %97 = vector.broadcast %cst_19 : f32 to vector<2x128xf32>
    %98 = arith.addf %97, %96 : vector<2x128xf32>
    %99 = arith.divf %97, %98 : vector<2x128xf32>
    %100 = math.tanh %94 : vector<2x128xf32>
    %101 = vector.extract_strided_slice %99 {offsets = [0, 0], sizes = [2, 32], strides = [1, 1]} : vector<2x128xf32> to vector<2x32xf32>
    %102 = vector.extract_strided_slice %99 {offsets = [0, 32], sizes = [2, 32], strides = [1, 1]} : vector<2x128xf32> to vector<2x32xf32>
    %103 = vector.extract_strided_slice %100 {offsets = [0, 64], sizes = [2, 32], strides = [1, 1]} : vector<2x128xf32> to vector<2x32xf32>
    %104 = vector.extract_strided_slice %99 {offsets = [0, 96], sizes = [2, 32], strides = [1, 1]} : vector<2x128xf32> to vector<2x32xf32>
    %105 = arith.mulf %102, %70 : vector<2x32xf32>
    %106 = arith.mulf %101, %103 : vector<2x32xf32>
    %107 = arith.addf %105, %106 : vector<2x32xf32>
    %108 = math.tanh %107 : vector<2x32xf32>
    %109 = arith.mulf %104, %108 : vector<2x32xf32>
    %110 = vector.extract_strided_slice %92 {offsets = [0, 128], sizes = [2, 128], strides = [1, 1]} : vector<2x256xf32> to vector<2x128xf32>
    %111 = vector.broadcast %37 : vector<1x128xf32> to vector<2x128xf32>
    %112 = arith.addf %110, %111 : vector<2x128xf32>
    %113 = arith.negf %112 : vector<2x128xf32>
    %114 = math.exp %113 : vector<2x128xf32>
    %cst_20 = arith.constant 1.000000e+00 : f32
    %115 = vector.broadcast %cst_20 : f32 to vector<2x128xf32>
    %116 = arith.addf %115, %114 : vector<2x128xf32>
    %117 = arith.divf %115, %116 : vector<2x128xf32>
    %118 = math.tanh %112 : vector<2x128xf32>
    %119 = vector.extract_strided_slice %117 {offsets = [0, 0], sizes = [2, 32], strides = [1, 1]} : vector<2x128xf32> to vector<2x32xf32>
    %120 = vector.extract_strided_slice %117 {offsets = [0, 32], sizes = [2, 32], strides = [1, 1]} : vector<2x128xf32> to vector<2x32xf32>
    %121 = vector.extract_strided_slice %118 {offsets = [0, 64], sizes = [2, 32], strides = [1, 1]} : vector<2x128xf32> to vector<2x32xf32>
    %122 = vector.extract_strided_slice %117 {offsets = [0, 96], sizes = [2, 32], strides = [1, 1]} : vector<2x128xf32> to vector<2x32xf32>
    %123 = arith.mulf %120, %88 : vector<2x32xf32>
    %124 = arith.mulf %119, %121 : vector<2x32xf32>
    %125 = arith.addf %123, %124 : vector<2x32xf32>
    %126 = math.tanh %125 : vector<2x32xf32>
    %127 = arith.mulf %122, %126 : vector<2x32xf32>
    %128 = tpu.concatenate %109, %127 in 1 : vector<2x32xf32>, vector<2x32xf32> -> vector<2x64xf32>
    %cst_21 = arith.constant dense<0.000000e+00> : vector<2x256xf32>
    %129 = tpu.matmul %128, %36, %cst_21 {dimension_numbers = #tpu.dot_dimension_numbers<[1], [0], [0], [1], [0, 0, 1, 1], [], []>} : vector<2x64xf32>, vector<64x256xf32>, vector<2x256xf32> -> vector<2x256xf32>
    %130 = vector.extract_strided_slice %129 {offsets = [0, 0], sizes = [2, 128], strides = [1, 1]} : vector<2x256xf32> to vector<2x128xf32>
    %131 = arith.addf %23, %130 : vector<2x128xf32>
    %132 = arith.negf %131 : vector<2x128xf32>
    %133 = math.exp %132 : vector<2x128xf32>
    %cst_22 = arith.constant 1.000000e+00 : f32
    %134 = vector.broadcast %cst_22 : f32 to vector<2x128xf32>
    %135 = arith.addf %134, %133 : vector<2x128xf32>
    %136 = arith.divf %134, %135 : vector<2x128xf32>
    %137 = math.tanh %131 : vector<2x128xf32>
    %138 = vector.extract_strided_slice %136 {offsets = [0, 0], sizes = [2, 32], strides = [1, 1]} : vector<2x128xf32> to vector<2x32xf32>
    %139 = vector.extract_strided_slice %136 {offsets = [0, 32], sizes = [2, 32], strides = [1, 1]} : vector<2x128xf32> to vector<2x32xf32>
    %140 = vector.extract_strided_slice %137 {offsets = [0, 64], sizes = [2, 32], strides = [1, 1]} : vector<2x128xf32> to vector<2x32xf32>
    %141 = vector.extract_strided_slice %136 {offsets = [0, 96], sizes = [2, 32], strides = [1, 1]} : vector<2x128xf32> to vector<2x32xf32>
    %142 = arith.mulf %139, %107 : vector<2x32xf32>
    %143 = arith.mulf %138, %140 : vector<2x32xf32>
    %144 = arith.addf %142, %143 : vector<2x32xf32>
    %145 = math.tanh %144 : vector<2x32xf32>
    %146 = arith.mulf %141, %145 : vector<2x32xf32>
    %147 = vector.extract_strided_slice %129 {offsets = [0, 128], sizes = [2, 128], strides = [1, 1]} : vector<2x256xf32> to vector<2x128xf32>
    %148 = vector.broadcast %37 : vector<1x128xf32> to vector<2x128xf32>
    %149 = arith.addf %147, %148 : vector<2x128xf32>
    %150 = arith.negf %149 : vector<2x128xf32>
    %151 = math.exp %150 : vector<2x128xf32>
    %cst_23 = arith.constant 1.000000e+00 : f32
    %152 = vector.broadcast %cst_23 : f32 to vector<2x128xf32>
    %153 = arith.addf %152, %151 : vector<2x128xf32>
    %154 = arith.divf %152, %153 : vector<2x128xf32>
    %155 = math.tanh %149 : vector<2x128xf32>
    %156 = vector.extract_strided_slice %154 {offsets = [0, 0], sizes = [2, 32], strides = [1, 1]} : vector<2x128xf32> to vector<2x32xf32>
    %157 = vector.extract_strided_slice %154 {offsets = [0, 32], sizes = [2, 32], strides = [1, 1]} : vector<2x128xf32> to vector<2x32xf32>
    %158 = vector.extract_strided_slice %155 {offsets = [0, 64], sizes = [2, 32], strides = [1, 1]} : vector<2x128xf32> to vector<2x32xf32>
    %159 = vector.extract_strided_slice %154 {offsets = [0, 96], sizes = [2, 32], strides = [1, 1]} : vector<2x128xf32> to vector<2x32xf32>
    %160 = arith.mulf %157, %125 : vector<2x32xf32>
    %161 = arith.mulf %156, %158 : vector<2x32xf32>
    %162 = arith.addf %160, %161 : vector<2x32xf32>
    %163 = math.tanh %162 : vector<2x32xf32>
    %164 = arith.mulf %159, %163 : vector<2x32xf32>
    %165 = tpu.concatenate %146, %164 in 1 : vector<2x32xf32>, vector<2x32xf32> -> vector<2x64xf32>
    %cst_24 = arith.constant dense<0.000000e+00> : vector<2x256xf32>
    %166 = tpu.matmul %165, %36, %cst_24 {dimension_numbers = #tpu.dot_dimension_numbers<[1], [0], [0], [1], [0, 0, 1, 1], [], []>} : vector<2x64xf32>, vector<64x256xf32>, vector<2x256xf32> -> vector<2x256xf32>
    %167 = vector.extract_strided_slice %166 {offsets = [0, 0], sizes = [2, 128], strides = [1, 1]} : vector<2x256xf32> to vector<2x128xf32>
    %168 = arith.addf %26, %167 : vector<2x128xf32>
    %169 = arith.negf %168 : vector<2x128xf32>
    %170 = math.exp %169 : vector<2x128xf32>
    %cst_25 = arith.constant 1.000000e+00 : f32
    %171 = vector.broadcast %cst_25 : f32 to vector<2x128xf32>
    %172 = arith.addf %171, %170 : vector<2x128xf32>
    %173 = arith.divf %171, %172 : vector<2x128xf32>
    %174 = math.tanh %168 : vector<2x128xf32>
    %175 = vector.extract_strided_slice %173 {offsets = [0, 0], sizes = [2, 32], strides = [1, 1]} : vector<2x128xf32> to vector<2x32xf32>
    %176 = vector.extract_strided_slice %173 {offsets = [0, 32], sizes = [2, 32], strides = [1, 1]} : vector<2x128xf32> to vector<2x32xf32>
    %177 = vector.extract_strided_slice %174 {offsets = [0, 64], sizes = [2, 32], strides = [1, 1]} : vector<2x128xf32> to vector<2x32xf32>
    %178 = vector.extract_strided_slice %173 {offsets = [0, 96], sizes = [2, 32], strides = [1, 1]} : vector<2x128xf32> to vector<2x32xf32>
    %179 = arith.mulf %176, %144 : vector<2x32xf32>
    %180 = arith.mulf %175, %177 : vector<2x32xf32>
    %181 = arith.addf %179, %180 : vector<2x32xf32>
    %182 = math.tanh %181 : vector<2x32xf32>
    %183 = arith.mulf %178, %182 : vector<2x32xf32>
    %184 = vector.extract_strided_slice %166 {offsets = [0, 128], sizes = [2, 128], strides = [1, 1]} : vector<2x256xf32> to vector<2x128xf32>
    %185 = vector.broadcast %37 : vector<1x128xf32> to vector<2x128xf32>
    %186 = arith.addf %184, %185 : vector<2x128xf32>
    %187 = arith.negf %186 : vector<2x128xf32>
    %188 = math.exp %187 : vector<2x128xf32>
    %cst_26 = arith.constant 1.000000e+00 : f32
    %189 = vector.broadcast %cst_26 : f32 to vector<2x128xf32>
    %190 = arith.addf %189, %188 : vector<2x128xf32>
    %191 = arith.divf %189, %190 : vector<2x128xf32>
    %192 = math.tanh %186 : vector<2x128xf32>
    %193 = vector.extract_strided_slice %191 {offsets = [0, 0], sizes = [2, 32], strides = [1, 1]} : vector<2x128xf32> to vector<2x32xf32>
    %194 = vector.extract_strided_slice %191 {offsets = [0, 32], sizes = [2, 32], strides = [1, 1]} : vector<2x128xf32> to vector<2x32xf32>
    %195 = vector.extract_strided_slice %192 {offsets = [0, 64], sizes = [2, 32], strides = [1, 1]} : vector<2x128xf32> to vector<2x32xf32>
    %196 = vector.extract_strided_slice %191 {offsets = [0, 96], sizes = [2, 32], strides = [1, 1]} : vector<2x128xf32> to vector<2x32xf32>
    %197 = arith.mulf %194, %162 : vector<2x32xf32>
    %198 = arith.mulf %193, %195 : vector<2x32xf32>
    %199 = arith.addf %197, %198 : vector<2x32xf32>
    %200 = math.tanh %199 : vector<2x32xf32>
    %201 = arith.mulf %196, %200 : vector<2x32xf32>
    %202 = tpu.concatenate %183, %201 in 1 : vector<2x32xf32>, vector<2x32xf32> -> vector<2x64xf32>
    %cst_27 = arith.constant dense<0.000000e+00> : vector<2x256xf32>
    %203 = tpu.matmul %202, %36, %cst_27 {dimension_numbers = #tpu.dot_dimension_numbers<[1], [0], [0], [1], [0, 0, 1, 1], [], []>} : vector<2x64xf32>, vector<64x256xf32>, vector<2x256xf32> -> vector<2x256xf32>
    %204 = vector.extract_strided_slice %203 {offsets = [0, 0], sizes = [2, 128], strides = [1, 1]} : vector<2x256xf32> to vector<2x128xf32>
    %205 = arith.addf %29, %204 : vector<2x128xf32>
    %206 = arith.negf %205 : vector<2x128xf32>
    %207 = math.exp %206 : vector<2x128xf32>
    %cst_28 = arith.constant 1.000000e+00 : f32
    %208 = vector.broadcast %cst_28 : f32 to vector<2x128xf32>
    %209 = arith.addf %208, %207 : vector<2x128xf32>
    %210 = arith.divf %208, %209 : vector<2x128xf32>
    %211 = math.tanh %205 : vector<2x128xf32>
    %212 = vector.extract_strided_slice %210 {offsets = [0, 0], sizes = [2, 32], strides = [1, 1]} : vector<2x128xf32> to vector<2x32xf32>
    %213 = vector.extract_strided_slice %210 {offsets = [0, 32], sizes = [2, 32], strides = [1, 1]} : vector<2x128xf32> to vector<2x32xf32>
    %214 = vector.extract_strided_slice %211 {offsets = [0, 64], sizes = [2, 32], strides = [1, 1]} : vector<2x128xf32> to vector<2x32xf32>
    %215 = vector.extract_strided_slice %210 {offsets = [0, 96], sizes = [2, 32], strides = [1, 1]} : vector<2x128xf32> to vector<2x32xf32>
    %216 = arith.mulf %213, %181 : vector<2x32xf32>
    %217 = arith.mulf %212, %214 : vector<2x32xf32>
    %218 = arith.addf %216, %217 : vector<2x32xf32>
    %219 = math.tanh %218 : vector<2x32xf32>
    %220 = arith.mulf %215, %219 : vector<2x32xf32>
    %221 = vector.extract_strided_slice %203 {offsets = [0, 128], sizes = [2, 128], strides = [1, 1]} : vector<2x256xf32> to vector<2x128xf32>
    %222 = vector.broadcast %37 : vector<1x128xf32> to vector<2x128xf32>
    %223 = arith.addf %221, %222 : vector<2x128xf32>
    %224 = arith.negf %223 : vector<2x128xf32>
    %225 = math.exp %224 : vector<2x128xf32>
    %cst_29 = arith.constant 1.000000e+00 : f32
    %226 = vector.broadcast %cst_29 : f32 to vector<2x128xf32>
    %227 = arith.addf %226, %225 : vector<2x128xf32>
    %228 = arith.divf %226, %227 : vector<2x128xf32>
    %229 = math.tanh %223 : vector<2x128xf32>
    %230 = vector.extract_strided_slice %228 {offsets = [0, 0], sizes = [2, 32], strides = [1, 1]} : vector<2x128xf32> to vector<2x32xf32>
    %231 = vector.extract_strided_slice %228 {offsets = [0, 32], sizes = [2, 32], strides = [1, 1]} : vector<2x128xf32> to vector<2x32xf32>
    %232 = vector.extract_strided_slice %229 {offsets = [0, 64], sizes = [2, 32], strides = [1, 1]} : vector<2x128xf32> to vector<2x32xf32>
    %233 = vector.extract_strided_slice %228 {offsets = [0, 96], sizes = [2, 32], strides = [1, 1]} : vector<2x128xf32> to vector<2x32xf32>
    %234 = arith.mulf %231, %199 : vector<2x32xf32>
    %235 = arith.mulf %230, %232 : vector<2x32xf32>
    %236 = arith.addf %234, %235 : vector<2x32xf32>
    %237 = math.tanh %236 : vector<2x32xf32>
    %238 = arith.mulf %233, %237 : vector<2x32xf32>
    %239 = tpu.concatenate %220, %238 in 1 : vector<2x32xf32>, vector<2x32xf32> -> vector<2x64xf32>
    %cst_30 = arith.constant dense<0.000000e+00> : vector<2x256xf32>
    %240 = tpu.matmul %239, %36, %cst_30 {dimension_numbers = #tpu.dot_dimension_numbers<[1], [0], [0], [1], [0, 0, 1, 1], [], []>} : vector<2x64xf32>, vector<64x256xf32>, vector<2x256xf32> -> vector<2x256xf32>
    %241 = vector.extract_strided_slice %240 {offsets = [0, 0], sizes = [2, 128], strides = [1, 1]} : vector<2x256xf32> to vector<2x128xf32>
    %242 = arith.addf %32, %241 : vector<2x128xf32>
    %243 = arith.negf %242 : vector<2x128xf32>
    %244 = math.exp %243 : vector<2x128xf32>
    %cst_31 = arith.constant 1.000000e+00 : f32
    %245 = vector.broadcast %cst_31 : f32 to vector<2x128xf32>
    %246 = arith.addf %245, %244 : vector<2x128xf32>
    %247 = arith.divf %245, %246 : vector<2x128xf32>
    %248 = math.tanh %242 : vector<2x128xf32>
    %249 = vector.extract_strided_slice %247 {offsets = [0, 0], sizes = [2, 32], strides = [1, 1]} : vector<2x128xf32> to vector<2x32xf32>
    %250 = vector.extract_strided_slice %247 {offsets = [0, 32], sizes = [2, 32], strides = [1, 1]} : vector<2x128xf32> to vector<2x32xf32>
    %251 = vector.extract_strided_slice %248 {offsets = [0, 64], sizes = [2, 32], strides = [1, 1]} : vector<2x128xf32> to vector<2x32xf32>
    %252 = vector.extract_strided_slice %247 {offsets = [0, 96], sizes = [2, 32], strides = [1, 1]} : vector<2x128xf32> to vector<2x32xf32>
    %253 = arith.mulf %250, %218 : vector<2x32xf32>
    %254 = arith.mulf %249, %251 : vector<2x32xf32>
    %255 = arith.addf %253, %254 : vector<2x32xf32>
    %256 = math.tanh %255 : vector<2x32xf32>
    %257 = arith.mulf %252, %256 : vector<2x32xf32>
    %258 = vector.extract_strided_slice %240 {offsets = [0, 128], sizes = [2, 128], strides = [1, 1]} : vector<2x256xf32> to vector<2x128xf32>
    %259 = vector.broadcast %37 : vector<1x128xf32> to vector<2x128xf32>
    %260 = arith.addf %258, %259 : vector<2x128xf32>
    %261 = arith.negf %260 : vector<2x128xf32>
    %262 = math.exp %261 : vector<2x128xf32>
    %cst_32 = arith.constant 1.000000e+00 : f32
    %263 = vector.broadcast %cst_32 : f32 to vector<2x128xf32>
    %264 = arith.addf %263, %262 : vector<2x128xf32>
    %265 = arith.divf %263, %264 : vector<2x128xf32>
    %266 = math.tanh %260 : vector<2x128xf32>
    %267 = vector.extract_strided_slice %265 {offsets = [0, 0], sizes = [2, 32], strides = [1, 1]} : vector<2x128xf32> to vector<2x32xf32>
    %268 = vector.extract_strided_slice %265 {offsets = [0, 32], sizes = [2, 32], strides = [1, 1]} : vector<2x128xf32> to vector<2x32xf32>
    %269 = vector.extract_strided_slice %266 {offsets = [0, 64], sizes = [2, 32], strides = [1, 1]} : vector<2x128xf32> to vector<2x32xf32>
    %270 = vector.extract_strided_slice %265 {offsets = [0, 96], sizes = [2, 32], strides = [1, 1]} : vector<2x128xf32> to vector<2x32xf32>
    %271 = arith.mulf %268, %236 : vector<2x32xf32>
    %272 = arith.mulf %267, %269 : vector<2x32xf32>
    %273 = arith.addf %271, %272 : vector<2x32xf32>
    %274 = math.tanh %273 : vector<2x32xf32>
    %275 = arith.mulf %270, %274 : vector<2x32xf32>
    %276 = tpu.concatenate %257, %275 in 1 : vector<2x32xf32>, vector<2x32xf32> -> vector<2x64xf32>
    %cst_33 = arith.constant dense<0.000000e+00> : vector<2x256xf32>
    %277 = tpu.matmul %276, %36, %cst_33 {dimension_numbers = #tpu.dot_dimension_numbers<[1], [0], [0], [1], [0, 0, 1, 1], [], []>} : vector<2x64xf32>, vector<64x256xf32>, vector<2x256xf32> -> vector<2x256xf32>
    %278 = vector.extract_strided_slice %277 {offsets = [0, 0], sizes = [2, 128], strides = [1, 1]} : vector<2x256xf32> to vector<2x128xf32>
    %279 = arith.addf %35, %278 : vector<2x128xf32>
    %280 = arith.negf %279 : vector<2x128xf32>
    %281 = math.exp %280 : vector<2x128xf32>
    %cst_34 = arith.constant 1.000000e+00 : f32
    %282 = vector.broadcast %cst_34 : f32 to vector<2x128xf32>
    %283 = arith.addf %282, %281 : vector<2x128xf32>
    %284 = arith.divf %282, %283 : vector<2x128xf32>
    %285 = math.tanh %279 : vector<2x128xf32>
    %286 = vector.extract_strided_slice %284 {offsets = [0, 0], sizes = [2, 32], strides = [1, 1]} : vector<2x128xf32> to vector<2x32xf32>
    %287 = vector.extract_strided_slice %284 {offsets = [0, 32], sizes = [2, 32], strides = [1, 1]} : vector<2x128xf32> to vector<2x32xf32>
    %288 = vector.extract_strided_slice %285 {offsets = [0, 64], sizes = [2, 32], strides = [1, 1]} : vector<2x128xf32> to vector<2x32xf32>
    %289 = vector.extract_strided_slice %284 {offsets = [0, 96], sizes = [2, 32], strides = [1, 1]} : vector<2x128xf32> to vector<2x32xf32>
    %290 = arith.mulf %287, %255 : vector<2x32xf32>
    %291 = arith.mulf %286, %288 : vector<2x32xf32>
    %292 = arith.addf %290, %291 : vector<2x32xf32>
    %293 = math.tanh %292 : vector<2x32xf32>
    %294 = arith.mulf %289, %293 : vector<2x32xf32>
    %295 = vector.extract_strided_slice %277 {offsets = [0, 128], sizes = [2, 128], strides = [1, 1]} : vector<2x256xf32> to vector<2x128xf32>
    %296 = vector.broadcast %37 : vector<1x128xf32> to vector<2x128xf32>
    %297 = arith.addf %295, %296 : vector<2x128xf32>
    %298 = arith.negf %297 : vector<2x128xf32>
    %299 = math.exp %298 : vector<2x128xf32>
    %cst_35 = arith.constant 1.000000e+00 : f32
    %300 = vector.broadcast %cst_35 : f32 to vector<2x128xf32>
    %301 = arith.addf %300, %299 : vector<2x128xf32>
    %302 = arith.divf %300, %301 : vector<2x128xf32>
    %303 = math.tanh %297 : vector<2x128xf32>
    %304 = vector.extract_strided_slice %302 {offsets = [0, 0], sizes = [2, 32], strides = [1, 1]} : vector<2x128xf32> to vector<2x32xf32>
    %305 = vector.extract_strided_slice %302 {offsets = [0, 32], sizes = [2, 32], strides = [1, 1]} : vector<2x128xf32> to vector<2x32xf32>
    %306 = vector.extract_strided_slice %303 {offsets = [0, 64], sizes = [2, 32], strides = [1, 1]} : vector<2x128xf32> to vector<2x32xf32>
    %307 = vector.extract_strided_slice %302 {offsets = [0, 96], sizes = [2, 32], strides = [1, 1]} : vector<2x128xf32> to vector<2x32xf32>
    %308 = arith.mulf %305, %273 : vector<2x32xf32>
    %309 = arith.mulf %304, %306 : vector<2x32xf32>
    %310 = arith.addf %308, %309 : vector<2x32xf32>
    %311 = math.tanh %310 : vector<2x32xf32>
    %312 = arith.mulf %307, %311 : vector<2x32xf32>
    %313 = tpu.concatenate %294, %312 in 1 : vector<2x32xf32>, vector<2x32xf32> -> vector<2x64xf32>
    %cst_36 = arith.constant dense<0.000000e+00> : vector<2x256xf32>
    %314 = tpu.matmul %313, %36, %cst_36 {dimension_numbers = #tpu.dot_dimension_numbers<[1], [0], [0], [1], [0, 0, 1, 1], [], []>} : vector<2x64xf32>, vector<64x256xf32>, vector<2x256xf32> -> vector<2x256xf32>
    %315 = vector.extract_strided_slice %314 {offsets = [0, 128], sizes = [2, 128], strides = [1, 1]} : vector<2x256xf32> to vector<2x128xf32>
    %316 = vector.broadcast %37 : vector<1x128xf32> to vector<2x128xf32>
    %317 = arith.addf %315, %316 : vector<2x128xf32>
    %318 = arith.negf %317 : vector<2x128xf32>
    %319 = math.exp %318 : vector<2x128xf32>
    %cst_37 = arith.constant 1.000000e+00 : f32
    %320 = vector.broadcast %cst_37 : f32 to vector<2x128xf32>
    %321 = arith.addf %320, %319 : vector<2x128xf32>
    %322 = arith.divf %320, %321 : vector<2x128xf32>
    %323 = math.tanh %317 : vector<2x128xf32>
    %324 = vector.extract_strided_slice %322 {offsets = [0, 0], sizes = [2, 32], strides = [1, 1]} : vector<2x128xf32> to vector<2x32xf32>
    %325 = vector.extract_strided_slice %322 {offsets = [0, 32], sizes = [2, 32], strides = [1, 1]} : vector<2x128xf32> to vector<2x32xf32>
    %326 = vector.extract_strided_slice %323 {offsets = [0, 64], sizes = [2, 32], strides = [1, 1]} : vector<2x128xf32> to vector<2x32xf32>
    %327 = vector.extract_strided_slice %322 {offsets = [0, 96], sizes = [2, 32], strides = [1, 1]} : vector<2x128xf32> to vector<2x32xf32>
    %328 = arith.mulf %325, %310 : vector<2x32xf32>
    %329 = arith.mulf %324, %326 : vector<2x32xf32>
    %330 = arith.addf %328, %329 : vector<2x32xf32>
    %331 = math.tanh %330 : vector<2x32xf32>
    %332 = arith.mulf %327, %331 : vector<2x32xf32>
    %333 = tpu.concatenate %90, %127, %164, %201, %238, %275, %312, %332 in 1 : vector<2x32xf32>, vector<2x32xf32>, vector<2x32xf32>, vector<2x32xf32>, vector<2x32xf32>, vector<2x32xf32>, vector<2x32xf32>, vector<2x32xf32> -> vector<2x256xf32>
    %c0_38 = arith.constant 0 : index
    %c0_39 = arith.constant 0 : index
    %334 = vector.load %arg5[%c0_38, %c0_39] : memref<256x35xf32, #tpu.memory_space<vmem>>, vector<256x35xf32>
    %cst_40 = arith.constant dense<0.000000e+00> : vector<2x35xf32>
    %335 = tpu.matmul %333, %334, %cst_40 {dimension_numbers = #tpu.dot_dimension_numbers<[1], [0], [0], [1], [0, 0, 1, 1], [], []>} : vector<2x256xf32>, vector<256x35xf32>, vector<2x35xf32> -> vector<2x35xf32>
    %c0_41 = arith.constant 0 : index
    %c0_42 = arith.constant 0 : index
    %336 = vector.load %arg6[%c0_41, %c0_42] : memref<1x35xf32, #tpu.memory_space<vmem>>, vector<1x35xf32>
    %337 = vector.broadcast %336 : vector<1x35xf32> to vector<2x35xf32>
    %338 = arith.addf %335, %337 : vector<2x35xf32>
    %c0_43 = arith.constant 0 : index
    %c0_44 = arith.constant 0 : index
    %339 = vector.load %arg7[%c0_43, %c0_44] : memref<2x35xf32, #tpu.memory_space<vmem>>, vector<2x35xf32>
    tpu.vector_store %arg7[%c0_43, %c0_44], %338 {strides = array<i32>} : memref<2x35xf32, #tpu.memory_space<vmem>>, vector<2x35xf32>,
    return
  }
}

</mosaic_0001>

<llo_original>
// kernel: lstm_model_forward.1
$region0: #{lstm_model_forward.1}
  #allocation0 [shape = 'u32[]', space=smem, size = 0x4, offset = 0x4, fixed_abs, tag = 'smem constant byte address 0x4 - core index']
  #allocation1 [shape = 'u32[72,128]{1,0:T(1,128)}', space=vmem, size = 0x9000, scoped, tag = 'internal scratch']
  %s0 = inlined_call_operand.vmem [shape: f32[2,8,26], index: 0, kind: input, shape index: {}]
  %s1 = inlined_call_operand.vmem [shape: f32[26,128], index: 1, kind: input, shape index: {}]
  %s2 = inlined_call_operand.vmem [shape: f32[1,128], index: 2, kind: input, shape index: {}]
  %s3 = inlined_call_operand.vmem [shape: f32[64,256], index: 3, kind: input, shape index: {}]
  %s4 = inlined_call_operand.vmem [shape: f32[1,128], index: 4, kind: input, shape index: {}]
  %s5 = inlined_call_operand.vmem [shape: f32[256,35], index: 5, kind: input, shape index: {}]
  %s6 = inlined_call_operand.vmem [shape: f32[1,35], index: 6, kind: input, shape index: {}]
  %s7 = inlined_call_operand.hbm [shape: f32[2,35], index: 7, kind: output, shape index: {}]
  %s8 = sld [smem:[#allocation0]]
  $region38: #{lstm_model_forward.1} parent=0
    _
  %s10 = ssub.s32 1, %s8
  %s11 = scalar_select 0, %s10, %s8
  $region1: #{lstm_model_forward.1} parent=0
    #allocation2 [shape = 'u8[1024]{0}', space=vmem, size = 0x400, scoped, tag = 'output window, operand 0, single buffered']
    #allocation3 [shape = 's32[1]{0}', space=sflag, size = 0x4, scoped, tag = 'scoped memory for lstm_model_forward.1']
    %12 = vsyncpa [#allocation3], 0
    // Predicated region
    $region2: #{lstm_model_forward.1} parent=1 // pred_check
      _
    $region3: #{lstm_model_forward.1} parent=1 // pred_check_branch
      %14 = sbr.rel (0) target = $region5
    $region4: #{lstm_model_forward.1} parent=1 // pred_region
      _
    $region5: #{lstm_model_forward.1} parent=1 // pred_fallthru
      _
    // Predicated region
    $region6: #{lstm_model_forward.1} parent=1 // pred_check
      _
    $region7: #{lstm_model_forward.1} parent=1 // pred_check_branch
      %16 = sbr.rel (0) target = $region9
    $region8: #{lstm_model_forward.1} parent=1 // pred_region
      _
    $region9: #{lstm_model_forward.1} parent=1 // pred_fallthru
      _
    // Predicated region
    $region10: #{lstm_model_forward.1} parent=1 // pred_check
      _
    $region11: #{lstm_model_forward.1} parent=1 // pred_check_branch
      %18 = sbr.rel (0) target = $region13
    $region12: #{lstm_model_forward.1} parent=1 // pred_region
      _
    $region13: #{lstm_model_forward.1} parent=1 // pred_fallthru
      _
    // Predicated region
    $region14: #{lstm_model_forward.1} parent=1 // pred_check
      _
    $region15: #{lstm_model_forward.1} parent=1 // pred_check_branch
      %20 = sbr.rel (0) target = $region17
    $region16: #{lstm_model_forward.1} parent=1 // pred_region
      _
    $region17: #{lstm_model_forward.1} parent=1 // pred_fallthru
      _
    // Predicated region
    $region18: #{lstm_model_forward.1} parent=1 // pred_check
      _
    $region19: #{lstm_model_forward.1} parent=1 // pred_check_branch
      %22 = sbr.rel (0) target = $region21
    $region20: #{lstm_model_forward.1} parent=1 // pred_region
      _
    $region21: #{lstm_model_forward.1} parent=1 // pred_fallthru
      _
    // Predicated region
    $region22: #{lstm_model_forward.1} parent=1 // pred_check
      _
    $region23: #{lstm_model_forward.1} parent=1 // pred_check_branch
      %24 = sbr.rel (0) target = $region25
    $region24: #{lstm_model_forward.1} parent=1 // pred_region
      _
    $region25: #{lstm_model_forward.1} parent=1 // pred_fallthru
      _
    // Predicated region
    $region26: #{lstm_model_forward.1} parent=1 // pred_check
      _
    $region27: #{lstm_model_forward.1} parent=1 // pred_check_branch
      %26 = sbr.rel (0) target = $region29
    $region28: #{lstm_model_forward.1} parent=1 // pred_region
      _
    $region29: #{lstm_model_forward.1} parent=1 // pred_fallthru
      _
    %v27 = vld [vmem:[%s1] sm:$0xff]
    %v28 = vld [vmem:[%s1 + $0x8] sm:$0xff]
    %v29 = vld [vmem:[%s1 + $0x10] sm:$0xff]
    %v30 = vld [vmem:[%s1 + $0x18] sm:$0x3]
    %v31 = vld [vmem:[%s2] sm:$0x1]
    %v32 = vld [vmem:[%s0] sm:$0xff]
    %v34 = vperm.slane %v31, 0
    %vm36 = vcmask 211968
    %v38 = vsel %vm36, %v32, 0
    %vm40 = vcmask 1041408
    %v42 = vsel %vm40, %v30, 0
    %44 = vmatpush.msra.mxu0 0.0
    %45 = vmatpush.msra.mxu0 0.0
    %46 = vmatpush.msra.mxu0 0.0
    %47 = vmatpush.msra.mxu0 0.0
    %48 = vmatpush.msra.mxu0 0.0
    %49 = vmatpush.msra.mxu0 0.0
    %50 = vmatpush.msra.mxu0 0.0
    %51 = vmatpush.msra.mxu0 0.0
    %52 = vmatpush.msra.mxu0 0.0
    %53 = vmatpush.msra.mxu0 0.0
    %54 = vmatpush.msra.mxu0 0.0
    %55 = vmatpush.msra.mxu0 0.0
    %56 = vmatpush.msra.mxu0 %v42
    %57 = vmatpush.msra.mxu0 %v29
    %58 = vmatpush.msra.mxu0 %v28
    %59 = vmatpush.msra.mxu0 %v27
    %60 = vmatmul.f32.gmra.mxu0 %v38
    %v61 = vpop.f32.mrf.mxu0
    %v62 = vadd.f32 %v34, %v61
    %63 = vdwg.mxu0
    %s64 = scalar_lea.vmem %s0, 8
    %v65 = vld [vmem:[%s64] sm:$0xff]
    %v67 = vsel %vm36, %v65, 0
    %69 = vmatpush.msra.mxu0 0.0
    %70 = vmatpush.msra.mxu0 0.0
    %71 = vmatpush.msra.mxu0 0.0
    %72 = vmatpush.msra.mxu0 0.0
    %73 = vmatpush.msra.mxu0 0.0
    %74 = vmatpush.msra.mxu0 0.0
    %75 = vmatpush.msra.mxu0 0.0
    %76 = vmatpush.msra.mxu0 0.0
    %77 = vmatpush.msra.mxu0 0.0
    %78 = vmatpush.msra.mxu0 0.0
    %79 = vmatpush.msra.mxu0 0.0
    %80 = vmatpush.msra.mxu0 0.0
    %81 = vmatpush.msra.mxu0 %v42
    %82 = vmatpush.msra.mxu0 %v29
    %83 = vmatpush.msra.mxu0 %v28
    %84 = vmatpush.msra.mxu0 %v27
    %85 = vmatmul.f32.gmra.mxu0 %v67
    %v86 = vpop.f32.mrf.mxu0
    %v87 = vadd.f32 %v34, %v86
    %88 = vdwg.mxu0
    %v90 = vrot.slane %v87, 7
    %vm92 = vcmask 1040384
    %v93 = vsel %vm92, %v62, %v90
    %v95 = vrot.slane %v62, 1
    %v97 = vsel %vm92, %v95, %v87
    %v98 = vrot.slane %v62, 2
    %v100 = vrot.slane %v87, 1
    %v102 = vsel %vm92, %v98, %v100
    %v103 = vrot.slane %v62, 3
    %v105 = vrot.slane %v87, 2
    %v107 = vsel %vm92, %v103, %v105
    %v108 = vrot.slane %v62, 4
    %v110 = vrot.slane %v87, 3
    %v112 = vsel %vm92, %v108, %v110
    %v113 = vrot.slane %v62, 5
    %v115 = vrot.slane %v87, 4
    %v117 = vsel %vm92, %v113, %v115
    %v118 = vrot.slane %v62, 6
    %v120 = vrot.slane %v87, 5
    %v122 = vsel %vm92, %v118, %v120
    %v123 = vrot.slane %v62, 7
    %v125 = vrot.slane %v87, 6
    %v127 = vsel %vm92, %v123, %v125
    %v128 = vld [vmem:[%s3] sm:$0xff]
    %v129 = vld [vmem:[%s3 + $0x8] sm:$0xff]
    %v130 = vld [vmem:[%s3 + $0x10] sm:$0xff]
    %v131 = vld [vmem:[%s3 + $0x18] sm:$0xff]
    %v132 = vld [vmem:[%s3 + $0x20] sm:$0xff]
    %v133 = vld [vmem:[%s3 + $0x28] sm:$0xff]
    %v134 = vld [vmem:[%s3 + $0x30] sm:$0xff]
    %v135 = vld [vmem:[%s3 + $0x38] sm:$0xff]
    %v136 = vld [vmem:[%s3 + $0x40] sm:$0xff]
    %v137 = vld [vmem:[%s3 + $0x48] sm:$0xff]
    %v138 = vld [vmem:[%s3 + $0x50] sm:$0xff]
    %v139 = vld [vmem:[%s3 + $0x58] sm:$0xff]
    %v140 = vld [vmem:[%s3 + $0x60] sm:$0xff]
    %v141 = vld [vmem:[%s3 + $0x68] sm:$0xff]
    %v142 = vld [vmem:[%s3 + $0x70] sm:$0xff]
    %v143 = vld [vmem:[%s3 + $0x78] sm:$0xff]
    %v144 = vld [vmem:[%s4] sm:$0x1]
    %v145 = vxor.u32 %v93, 2147483648
    %v146 = vmul.f32 %v145, 1.442695
    %v147 = vpow.pop %v146
    %v148 = vadd.f32 %v147, 1.0
    %v149 = vrcp.pop %v148
    %v150 = vmul.f32 %v148, %v149
    %v151 = vsub.f32 1.0, %v150
    %v152 = vmul.f32 %v149, %v151
    %v153 = vadd.f32 %v149, %v152
    %vm154 = vweird.f32 %v148
    %vm155 = vweird.f32 %v149
    %vm156 = vmor %vm154, %vm155
    %v157 = vsel %vm156, %v149, %v153
    %v158 = vand.u32 2147483647, %v148
    %vm159 = vcmp.eq.f32.partialorder %v158, 8.507059e+37
    %v160 = vand.u32 %v148, 2147483648
    %v161 = vor.u32 1.1754944e-38, %v160
    %v162 = vsel %vm159, %v161, %v157
    %v163 = vmul.f32 1.0, %v162
    %v164 = vtanh.pop %v93
    %v165 = vmul.f32 %v163, 0.0
    %167 = vrot.lane.b32.xlu0 %v164, 64
    %v168 = vpop.permute.xlu0 %167
    %v170 = vmul.f32 %v163, %v168
    %172 = vrot.lane.b32.xlu0 %v170, 32
    %v173 = vpop.permute.xlu0 %172
    %v175 = vadd.f32 %v165, %v173
    %v176 = vtanh.pop %v175
    %178 = vrot.lane.b32.xlu0 %v176, 64
    %v179 = vpop.permute.xlu0 %178
    %v181 = vmul.f32 %v163, %v179
    %183 = vrot.lane.b32.xlu0 %v181, 32
    %v184 = vpop.permute.xlu0 %183
    %vm186 = vcmask 261120
    %v187 = vsel %vm186, %v184, 0.0
    %vm188 = vcmask 523264
    %v190 = vsel %vm188, %v187, 0
    %192 = vmatpush.msra.mxu0 0.0
    %193 = vmatpush.msra.mxu0 0.0
    %194 = vmatpush.msra.mxu0 0.0
    %195 = vmatpush.msra.mxu0 0.0
    %196 = vmatpush.msra.mxu0 0.0
    %197 = vmatpush.msra.mxu0 0.0
    %198 = vmatpush.msra.mxu0 0.0
    %199 = vmatpush.msra.mxu0 0.0
    %200 = vmatpush.msra.mxu0 %v142
    %201 = vmatpush.msra.mxu0 %v140
    %202 = vmatpush.msra.mxu0 %v138
    %203 = vmatpush.msra.mxu0 %v136
    %204 = vmatpush.msra.mxu0 %v134
    %205 = vmatpush.msra.mxu0 %v132
    %206 = vmatpush.msra.mxu0 %v130
    %207 = vmatpush.msra.mxu0 %v128
    %208 = vmatmul.f32.gmra.mxu0 %v190
    %v209 = vpop.f32.mrf.mxu0
    %v210 = vadd.f32 0.0, %v209
    %211 = vdwg.mxu0
    %212 = vmatpush.msra.mxu0 0.0
    %213 = vmatpush.msra.mxu0 0.0
    %214 = vmatpush.msra.mxu0 0.0
    %215 = vmatpush.msra.mxu0 0.0
    %216 = vmatpush.msra.mxu0 0.0
    %217 = vmatpush.msra.mxu0 0.0
    %218 = vmatpush.msra.mxu0 0.0
    %219 = vmatpush.msra.mxu0 0.0
    %220 = vmatpush.msra.mxu0 %v143
    %221 = vmatpush.msra.mxu0 %v141
    %222 = vmatpush.msra.mxu0 %v139
    %223 = vmatpush.msra.mxu0 %v137
    %224 = vmatpush.msra.mxu0 %v135
    %225 = vmatpush.msra.mxu0 %v133
    %226 = vmatpush.msra.mxu0 %v131
    %227 = vmatpush.msra.mxu0 %v129
    %228 = vmatmul.f32.gmra.mxu0 %v190
    %v229 = vpop.f32.mrf.mxu0
    %v230 = vadd.f32 0.0, %v229
    %231 = vdwg.mxu0
    %v232 = vadd.f32 %v97, %v210
    %v233 = vxor.u32 %v232, 2147483648
    %v234 = vmul.f32 %v233, 1.442695
    %v235 = vpow.pop %v234
    %v236 = vadd.f32 %v235, 1.0
    %v237 = vrcp.pop %v236
    %v238 = vmul.f32 %v236, %v237
    %v239 = vsub.f32 1.0, %v238
    %v240 = vmul.f32 %v237, %v239
    %v241 = vadd.f32 %v237, %v240
    %vm242 = vweird.f32 %v236
    %vm243 = vweird.f32 %v237
    %vm244 = vmor %vm242, %vm243
    %v245 = vsel %vm244, %v237, %v241
    %v246 = vand.u32 2147483647, %v236
    %vm247 = vcmp.eq.f32.partialorder %v246, 8.507059e+37
    %v248 = vand.u32 %v236, 2147483648
    %v249 = vor.u32 1.1754944e-38, %v248
    %v250 = vsel %vm247, %v249, %v245
    %v251 = vmul.f32 1.0, %v250
    %v252 = vtanh.pop %v232
    %v253 = vmul.f32 %v251, %v175
    %255 = vrot.lane.b32.xlu0 %v252, 64
    %v256 = vpop.permute.xlu0 %255
    %v258 = vmul.f32 %v251, %v256
    %260 = vrot.lane.b32.xlu0 %v258, 32
    %v261 = vpop.permute.xlu0 %260
    %v263 = vadd.f32 %v253, %v261
    %v264 = vtanh.pop %v263
    %266 = vrot.lane.b32.xlu0 %v264, 64
    %v267 = vpop.permute.xlu0 %266
    %v269 = vmul.f32 %v251, %v267
    %v271 = vperm.slane %v144, 0
    %v273 = vadd.f32 %v230, %v271
    %v274 = vxor.u32 %v273, 2147483648
    %v275 = vmul.f32 %v274, 1.442695
    %v276 = vpow.pop %v275
    %v277 = vadd.f32 %v276, 1.0
    %v278 = vrcp.pop %v277
    %v279 = vmul.f32 %v277, %v278
    %v280 = vsub.f32 1.0, %v279
    %v281 = vmul.f32 %v278, %v280
    %v282 = vadd.f32 %v278, %v281
    %vm283 = vweird.f32 %v277
    %vm284 = vweird.f32 %v278
    %vm285 = vmor %vm283, %vm284
    %v286 = vsel %vm285, %v278, %v282
    %v287 = vand.u32 2147483647, %v277
    %vm288 = vcmp.eq.f32.partialorder %v287, 8.507059e+37
    %v289 = vand.u32 %v277, 2147483648
    %v290 = vor.u32 1.1754944e-38, %v289
    %v291 = vsel %vm288, %v290, %v286
    %v292 = vmul.f32 1.0, %v291
    %v293 = vtanh.pop %v273
    %v294 = vmul.f32 %v292, 0.0
    %296 = vrot.lane.b32.xlu0 %v293, 64
    %v297 = vpop.permute.xlu0 %296
    %v299 = vmul.f32 %v292, %v297
    %301 = vrot.lane.b32.xlu0 %v299, 32
    %v302 = vpop.permute.xlu0 %301
    %v304 = vadd.f32 %v294, %v302
    %v305 = vtanh.pop %v304
    %307 = vrot.lane.b32.xlu0 %v305, 64
    %v308 = vpop.permute.xlu0 %307
    %v310 = vmul.f32 %v292, %v308
    %312 = vrot.lane.b32.xlu0 %v269, 32
    %v313 = vpop.permute.xlu0 %312
    %316 = vrot.lane.b32.xlu0 %v310, 64
    %v317 = vpop.permute.xlu0 %316
    %v319 = vsel %vm186, %v313, %v317
    %v321 = vsel %vm188, %v319, 0
    %323 = vmatpush.msra.mxu0 0.0
    %324 = vmatpush.msra.mxu0 0.0
    %325 = vmatpush.msra.mxu0 0.0
    %326 = vmatpush.msra.mxu0 0.0
    %327 = vmatpush.msra.mxu0 0.0
    %328 = vmatpush.msra.mxu0 0.0
    %329 = vmatpush.msra.mxu0 0.0
    %330 = vmatpush.msra.mxu0 0.0
    %331 = vmatpush.msra.mxu0 %v142
    %332 = vmatpush.msra.mxu0 %v140
    %333 = vmatpush.msra.mxu0 %v138
    %334 = vmatpush.msra.mxu0 %v136
    %335 = vmatpush.msra.mxu0 %v134
    %336 = vmatpush.msra.mxu0 %v132
    %337 = vmatpush.msra.mxu0 %v130
    %338 = vmatpush.msra.mxu0 %v128
    %339 = vmatmul.f32.gmra.mxu0 %v321
    %v340 = vpop.f32.mrf.mxu0
    %v341 = vadd.f32 0.0, %v340
    %342 = vdwg.mxu0
    %343 = vmatpush.msra.mxu0 0.0
    %344 = vmatpush.msra.mxu0 0.0
    %345 = vmatpush.msra.mxu0 0.0
    %346 = vmatpush.msra.mxu0 0.0
    %347 = vmatpush.msra.mxu0 0.0
    %348 = vmatpush.msra.mxu0 0.0
    %349 = vmatpush.msra.mxu0 0.0
    %350 = vmatpush.msra.mxu0 0.0
    %351 = vmatpush.msra.mxu0 %v143
    %352 = vmatpush.msra.mxu0 %v141
    %353 = vmatpush.msra.mxu0 %v139
    %354 = vmatpush.msra.mxu0 %v137
    %355 = vmatpush.msra.mxu0 %v135
    %356 = vmatpush.msra.mxu0 %v133
    %357 = vmatpush.msra.mxu0 %v131
    %358 = vmatpush.msra.mxu0 %v129
    %359 = vmatmul.f32.gmra.mxu0 %v321
    %v360 = vpop.f32.mrf.mxu0
    %v361 = vadd.f32 0.0, %v360
    %362 = vdwg.mxu0
    %v363 = vadd.f32 %v102, %v341
    %v364 = vxor.u32 %v363, 2147483648
    %v365 = vmul.f32 %v364, 1.442695
    %v366 = vpow.pop %v365
    %v367 = vadd.f32 %v366, 1.0
    %v368 = vrcp.pop %v367
    %v369 = vmul.f32 %v367, %v368
    %v370 = vsub.f32 1.0, %v369
    %v371 = vmul.f32 %v368, %v370
    %v372 = vadd.f32 %v368, %v371
    %vm373 = vweird.f32 %v367
    %vm374 = vweird.f32 %v368
    %vm375 = vmor %vm373, %vm374
    %v376 = vsel %vm375, %v368, %v372
    %v377 = vand.u32 2147483647, %v367
    %vm378 = vcmp.eq.f32.partialorder %v377, 8.507059e+37
    %v379 = vand.u32 %v367, 2147483648
    %v380 = vor.u32 1.1754944e-38, %v379
    %v381 = vsel %vm378, %v380, %v376
    %v382 = vmul.f32 1.0, %v381
    %v383 = vtanh.pop %v363
    %v384 = vmul.f32 %v382, %v263
    %386 = vrot.lane.b32.xlu0 %v383, 64
    %v387 = vpop.permute.xlu0 %386
    %v389 = vmul.f32 %v382, %v387
    %391 = vrot.lane.b32.xlu0 %v389, 32
    %v392 = vpop.permute.xlu0 %391
    %v394 = vadd.f32 %v384, %v392
    %v395 = vtanh.pop %v394
    %397 = vrot.lane.b32.xlu0 %v395, 64
    %v398 = vpop.permute.xlu0 %397
    %v400 = vmul.f32 %v382, %v398
    %v401 = vadd.f32 %v361, %v271
    %v402 = vxor.u32 %v401, 2147483648
    %v403 = vmul.f32 %v402, 1.442695
    %v404 = vpow.pop %v403
    %v405 = vadd.f32 %v404, 1.0
    %v406 = vrcp.pop %v405
    %v407 = vmul.f32 %v405, %v406
    %v408 = vsub.f32 1.0, %v407
    %v409 = vmul.f32 %v406, %v408
    %v410 = vadd.f32 %v406, %v409
    %vm411 = vweird.f32 %v405
    %vm412 = vweird.f32 %v406
    %vm413 = vmor %vm411, %vm412
    %v414 = vsel %vm413, %v406, %v410
    %v415 = vand.u32 2147483647, %v405
    %vm416 = vcmp.eq.f32.partialorder %v415, 8.507059e+37
    %v417 = vand.u32 %v405, 2147483648
    %v418 = vor.u32 1.1754944e-38, %v417
    %v419 = vsel %vm416, %v418, %v414
    %v420 = vmul.f32 1.0, %v419
    %v421 = vtanh.pop %v401
    %v422 = vmul.f32 %v420, %v304
    %424 = vrot.lane.b32.xlu0 %v421, 64
    %v425 = vpop.permute.xlu0 %424
    %v427 = vmul.f32 %v420, %v425
    %429 = vrot.lane.b32.xlu0 %v427, 32
    %v430 = vpop.permute.xlu0 %429
    %v432 = vadd.f32 %v422, %v430
    %v433 = vtanh.pop %v432
    %435 = vrot.lane.b32.xlu0 %v433, 64
    %v436 = vpop.permute.xlu0 %435
    %v438 = vmul.f32 %v420, %v436
    %440 = vrot.lane.b32.xlu0 %v400, 32
    %v441 = vpop.permute.xlu0 %440
    %444 = vrot.lane.b32.xlu0 %v438, 64
    %v445 = vpop.permute.xlu0 %444
    %v447 = vsel %vm186, %v441, %v445
    %v449 = vsel %vm188, %v447, 0
    %451 = vmatpush.msra.mxu0 0.0
    %452 = vmatpush.msra.mxu0 0.0
    %453 = vmatpush.msra.mxu0 0.0
    %454 = vmatpush.msra.mxu0 0.0
    %455 = vmatpush.msra.mxu0 0.0
    %456 = vmatpush.msra.mxu0 0.0
    %457 = vmatpush.msra.mxu0 0.0
    %458 = vmatpush.msra.mxu0 0.0
    %459 = vmatpush.msra.mxu0 %v142
    %460 = vmatpush.msra.mxu0 %v140
    %461 = vmatpush.msra.mxu0 %v138
    %462 = vmatpush.msra.mxu0 %v136
    %463 = vmatpush.msra.mxu0 %v134
    %464 = vmatpush.msra.mxu0 %v132
    %465 = vmatpush.msra.mxu0 %v130
    %466 = vmatpush.msra.mxu0 %v128
    %467 = vmatmul.f32.gmra.mxu0 %v449
    %v468 = vpop.f32.mrf.mxu0
    %v469 = vadd.f32 0.0, %v468
    %470 = vdwg.mxu0
    %471 = vmatpush.msra.mxu0 0.0
    %472 = vmatpush.msra.mxu0 0.0
    %473 = vmatpush.msra.mxu0 0.0
    %474 = vmatpush.msra.mxu0 0.0
    %475 = vmatpush.msra.mxu0 0.0
    %476 = vmatpush.msra.mxu0 0.0
    %477 = vmatpush.msra.mxu0 0.0
    %478 = vmatpush.msra.mxu0 0.0
    %479 = vmatpush.msra.mxu0 %v143
    %480 = vmatpush.msra.mxu0 %v141
    %481 = vmatpush.msra.mxu0 %v139
    %482 = vmatpush.msra.mxu0 %v137
    %483 = vmatpush.msra.mxu0 %v135
    %484 = vmatpush.msra.mxu0 %v133
    %485 = vmatpush.msra.mxu0 %v131
    %486 = vmatpush.msra.mxu0 %v129
    %487 = vmatmul.f32.gmra.mxu0 %v449
    %v488 = vpop.f32.mrf.mxu0
    %v489 = vadd.f32 0.0, %v488
    %490 = vdwg.mxu0
    %v491 = vadd.f32 %v107, %v469
    %v492 = vxor.u32 %v491, 2147483648
    %v493 = vmul.f32 %v492, 1.442695
    %v494 = vpow.pop %v493
    %v495 = vadd.f32 %v494, 1.0
    %v496 = vrcp.pop %v495
    %v497 = vmul.f32 %v495, %v496
    %v498 = vsub.f32 1.0, %v497
    %v499 = vmul.f32 %v496, %v498
    %v500 = vadd.f32 %v496, %v499
    %vm501 = vweird.f32 %v495
    %vm502 = vweird.f32 %v496
    %vm503 = vmor %vm501, %vm502
    %v504 = vsel %vm503, %v496, %v500
    %v505 = vand.u32 2147483647, %v495
    %vm506 = vcmp.eq.f32.partialorder %v505, 8.507059e+37
    %v507 = vand.u32 %v495, 2147483648
    %v508 = vor.u32 1.1754944e-38, %v507
    %v509 = vsel %vm506, %v508, %v504
    %v510 = vmul.f32 1.0, %v509
    %v511 = vtanh.pop %v491
    %v512 = vmul.f32 %v510, %v394
    %514 = vrot.lane.b32.xlu0 %v511, 64
    %v515 = vpop.permute.xlu0 %514
    %v517 = vmul.f32 %v510, %v515
    %519 = vrot.lane.b32.xlu0 %v517, 32
    %v520 = vpop.permute.xlu0 %519
    %v522 = vadd.f32 %v512, %v520
    %v523 = vtanh.pop %v522
    %525 = vrot.lane.b32.xlu0 %v523, 64
    %v526 = vpop.permute.xlu0 %525
    %v528 = vmul.f32 %v510, %v526
    %v529 = vadd.f32 %v489, %v271
    %v530 = vxor.u32 %v529, 2147483648
    %v531 = vmul.f32 %v530, 1.442695
    %v532 = vpow.pop %v531
    %v533 = vadd.f32 %v532, 1.0
    %v534 = vrcp.pop %v533
    %v535 = vmul.f32 %v533, %v534
    %v536 = vsub.f32 1.0, %v535
    %v537 = vmul.f32 %v534, %v536
    %v538 = vadd.f32 %v534, %v537
    %vm539 = vweird.f32 %v533
    %vm540 = vweird.f32 %v534
    %vm541 = vmor %vm539, %vm540
    %v542 = vsel %vm541, %v534, %v538
    %v543 = vand.u32 2147483647, %v533
    %vm544 = vcmp.eq.f32.partialorder %v543, 8.507059e+37
    %v545 = vand.u32 %v533, 2147483648
    %v546 = vor.u32 1.1754944e-38, %v545
    %v547 = vsel %vm544, %v546, %v542
    %v548 = vmul.f32 1.0, %v547
    %v549 = vtanh.pop %v529
    %v550 = vmul.f32 %v548, %v432
    %552 = vrot.lane.b32.xlu0 %v549, 64
    %v553 = vpop.permute.xlu0 %552
    %v555 = vmul.f32 %v548, %v553
    %557 = vrot.lane.b32.xlu0 %v555, 32
    %v558 = vpop.permute.xlu0 %557
    %v560 = vadd.f32 %v550, %v558
    %v561 = vtanh.pop %v560
    %563 = vrot.lane.b32.xlu0 %v561, 64
    %v564 = vpop.permute.xlu0 %563
    %v566 = vmul.f32 %v548, %v564
    %568 = vrot.lane.b32.xlu0 %v528, 32
    %v569 = vpop.permute.xlu0 %568
    %572 = vrot.lane.b32.xlu0 %v566, 64
    %v573 = vpop.permute.xlu0 %572
    %v575 = vsel %vm186, %v569, %v573
    %v577 = vsel %vm188, %v575, 0
    %579 = vmatpush.msra.mxu0 0.0
    %580 = vmatpush.msra.mxu0 0.0
    %581 = vmatpush.msra.mxu0 0.0
    %582 = vmatpush.msra.mxu0 0.0
    %583 = vmatpush.msra.mxu0 0.0
    %584 = vmatpush.msra.mxu0 0.0
    %585 = vmatpush.msra.mxu0 0.0
    %586 = vmatpush.msra.mxu0 0.0
    %587 = vmatpush.msra.mxu0 %v142
    %588 = vmatpush.msra.mxu0 %v140
    %589 = vmatpush.msra.mxu0 %v138
    %590 = vmatpush.msra.mxu0 %v136
    %591 = vmatpush.msra.mxu0 %v134
    %592 = vmatpush.msra.mxu0 %v132
    %593 = vmatpush.msra.mxu0 %v130
    %594 = vmatpush.msra.mxu0 %v128
    %595 = vmatmul.f32.gmra.mxu0 %v577
    %v596 = vpop.f32.mrf.mxu0
    %v597 = vadd.f32 0.0, %v596
    %598 = vdwg.mxu0
    %599 = vmatpush.msra.mxu0 0.0
    %600 = vmatpush.msra.mxu0 0.0
    %601 = vmatpush.msra.mxu0 0.0
    %602 = vmatpush.msra.mxu0 0.0
    %603 = vmatpush.msra.mxu0 0.0
    %604 = vmatpush.msra.mxu0 0.0
    %605 = vmatpush.msra.mxu0 0.0
    %606 = vmatpush.msra.mxu0 0.0
    %607 = vmatpush.msra.mxu0 %v143
    %608 = vmatpush.msra.mxu0 %v141
    %609 = vmatpush.msra.mxu0 %v139
    %610 = vmatpush.msra.mxu0 %v137
    %611 = vmatpush.msra.mxu0 %v135
    %612 = vmatpush.msra.mxu0 %v133
    %613 = vmatpush.msra.mxu0 %v131
    %614 = vmatpush.msra.mxu0 %v129
    %615 = vmatmul.f32.gmra.mxu0 %v577
    %v616 = vpop.f32.mrf.mxu0
    %v617 = vadd.f32 0.0, %v616
    %618 = vdwg.mxu0
    %v619 = vadd.f32 %v112, %v597
    %v620 = vxor.u32 %v619, 2147483648
    %v621 = vmul.f32 %v620, 1.442695
    %v622 = vpow.pop %v621
    %v623 = vadd.f32 %v622, 1.0
    %v624 = vrcp.pop %v623
    %v625 = vmul.f32 %v623, %v624
    %v626 = vsub.f32 1.0, %v625
    %v627 = vmul.f32 %v624, %v626
    %v628 = vadd.f32 %v624, %v627
    %vm629 = vweird.f32 %v623
    %vm630 = vweird.f32 %v624
    %vm631 = vmor %vm629, %vm630
    %v632 = vsel %vm631, %v624, %v628
    %v633 = vand.u32 2147483647, %v623
    %vm634 = vcmp.eq.f32.partialorder %v633, 8.507059e+37
    %v635 = vand.u32 %v623, 2147483648
    %v636 = vor.u32 1.1754944e-38, %v635
    %v637 = vsel %vm634, %v636, %v632
    %v638 = vmul.f32 1.0, %v637
    %v639 = vtanh.pop %v619
    %v640 = vmul.f32 %v638, %v522
    %642 = vrot.lane.b32.xlu0 %v639, 64
    %v643 = vpop.permute.xlu0 %642
    %v645 = vmul.f32 %v638, %v643
    %647 = vrot.lane.b32.xlu0 %v645, 32
    %v648 = vpop.permute.xlu0 %647
    %v650 = vadd.f32 %v640, %v648
    %v651 = vtanh.pop %v650
    %653 = vrot.lane.b32.xlu0 %v651, 64
    %v654 = vpop.permute.xlu0 %653
    %v656 = vmul.f32 %v638, %v654
    %v657 = vadd.f32 %v617, %v271
    %v658 = vxor.u32 %v657, 2147483648
    %v659 = vmul.f32 %v658, 1.442695
    %v660 = vpow.pop %v659
    %v661 = vadd.f32 %v660, 1.0
    %v662 = vrcp.pop %v661
    %v663 = vmul.f32 %v661, %v662
    %v664 = vsub.f32 1.0, %v663
    %v665 = vmul.f32 %v662, %v664
    %v666 = vadd.f32 %v662, %v665
    %vm667 = vweird.f32 %v661
    %vm668 = vweird.f32 %v662
    %vm669 = vmor %vm667, %vm668
    %v670 = vsel %vm669, %v662, %v666
    %v671 = vand.u32 2147483647, %v661
    %vm672 = vcmp.eq.f32.partialorder %v671, 8.507059e+37
    %v673 = vand.u32 %v661, 2147483648
    %v674 = vor.u32 1.1754944e-38, %v673
    %v675 = vsel %vm672, %v674, %v670
    %v676 = vmul.f32 1.0, %v675
    %v677 = vtanh.pop %v657
    %v678 = vmul.f32 %v676, %v560
    %680 = vrot.lane.b32.xlu0 %v677, 64
    %v681 = vpop.permute.xlu0 %680
    %v683 = vmul.f32 %v676, %v681
    %685 = vrot.lane.b32.xlu0 %v683, 32
    %v686 = vpop.permute.xlu0 %685
    %v688 = vadd.f32 %v678, %v686
    %v689 = vtanh.pop %v688
    %691 = vrot.lane.b32.xlu0 %v689, 64
    %v692 = vpop.permute.xlu0 %691
    %v694 = vmul.f32 %v676, %v692
    %696 = vrot.lane.b32.xlu0 %v656, 32
    %v697 = vpop.permute.xlu0 %696
    %700 = vrot.lane.b32.xlu0 %v694, 64
    %v701 = vpop.permute.xlu0 %700
    %v703 = vsel %vm186, %v697, %v701
    %v705 = vsel %vm188, %v703, 0
    %707 = vmatpush.msra.mxu0 0.0
    %708 = vmatpush.msra.mxu0 0.0
    %709 = vmatpush.msra.mxu0 0.0
    %710 = vmatpush.msra.mxu0 0.0
    %711 = vmatpush.msra.mxu0 0.0
    %712 = vmatpush.msra.mxu0 0.0
    %713 = vmatpush.msra.mxu0 0.0
    %714 = vmatpush.msra.mxu0 0.0
    %715 = vmatpush.msra.mxu0 %v142
    %716 = vmatpush.msra.mxu0 %v140
    %717 = vmatpush.msra.mxu0 %v138
    %718 = vmatpush.msra.mxu0 %v136
    %719 = vmatpush.msra.mxu0 %v134
    %720 = vmatpush.msra.mxu0 %v132
    %721 = vmatpush.msra.mxu0 %v130
    %722 = vmatpush.msra.mxu0 %v128
    %723 = vmatmul.f32.gmra.mxu0 %v705
    %v724 = vpop.f32.mrf.mxu0
    %v725 = vadd.f32 0.0, %v724
    %726 = vdwg.mxu0
    %727 = vmatpush.msra.mxu0 0.0
    %728 = vmatpush.msra.mxu0 0.0
    %729 = vmatpush.msra.mxu0 0.0
    %730 = vmatpush.msra.mxu0 0.0
    %731 = vmatpush.msra.mxu0 0.0
    %732 = vmatpush.msra.mxu0 0.0
    %733 = vmatpush.msra.mxu0 0.0
    %734 = vmatpush.msra.mxu0 0.0
    %735 = vmatpush.msra.mxu0 %v143
    %736 = vmatpush.msra.mxu0 %v141
    %737 = vmatpush.msra.mxu0 %v139
    %738 = vmatpush.msra.mxu0 %v137
    %739 = vmatpush.msra.mxu0 %v135
    %740 = vmatpush.msra.mxu0 %v133
    %741 = vmatpush.msra.mxu0 %v131
    %742 = vmatpush.msra.mxu0 %v129
    %743 = vmatmul.f32.gmra.mxu0 %v705
    %v744 = vpop.f32.mrf.mxu0
    %v745 = vadd.f32 0.0, %v744
    %746 = vdwg.mxu0
    %v747 = vadd.f32 %v117, %v725
    %v748 = vxor.u32 %v747, 2147483648
    %v749 = vmul.f32 %v748, 1.442695
    %v750 = vpow.pop %v749
    %v751 = vadd.f32 %v750, 1.0
    %v752 = vrcp.pop %v751
    %v753 = vmul.f32 %v751, %v752
    %v754 = vsub.f32 1.0, %v753
    %v755 = vmul.f32 %v752, %v754
    %v756 = vadd.f32 %v752, %v755
    %vm757 = vweird.f32 %v751
    %vm758 = vweird.f32 %v752
    %vm759 = vmor %vm757, %vm758
    %v760 = vsel %vm759, %v752, %v756
    %v761 = vand.u32 2147483647, %v751
    %vm762 = vcmp.eq.f32.partialorder %v761, 8.507059e+37
    %v763 = vand.u32 %v751, 2147483648
    %v764 = vor.u32 1.1754944e-38, %v763
    %v765 = vsel %vm762, %v764, %v760
    %v766 = vmul.f32 1.0, %v765
    %v767 = vtanh.pop %v747
    %v768 = vmul.f32 %v766, %v650
    %770 = vrot.lane.b32.xlu0 %v767, 64
    %v771 = vpop.permute.xlu0 %770
    %v773 = vmul.f32 %v766, %v771
    %775 = vrot.lane.b32.xlu0 %v773, 32
    %v776 = vpop.permute.xlu0 %775
    %v778 = vadd.f32 %v768, %v776
    %v779 = vtanh.pop %v778
    %781 = vrot.lane.b32.xlu0 %v779, 64
    %v782 = vpop.permute.xlu0 %781
    %v784 = vmul.f32 %v766, %v782
    %v785 = vadd.f32 %v745, %v271
    %v786 = vxor.u32 %v785, 2147483648
    %v787 = vmul.f32 %v786, 1.442695
    %v788 = vpow.pop %v787
    %v789 = vadd.f32 %v788, 1.0
    %v790 = vrcp.pop %v789
    %v791 = vmul.f32 %v789, %v790
    %v792 = vsub.f32 1.0, %v791
    %v793 = vmul.f32 %v790, %v792
    %v794 = vadd.f32 %v790, %v793
    %vm795 = vweird.f32 %v789
    %vm796 = vweird.f32 %v790
    %vm797 = vmor %vm795, %vm796
    %v798 = vsel %vm797, %v790, %v794
    %v799 = vand.u32 2147483647, %v789
    %vm800 = vcmp.eq.f32.partialorder %v799, 8.507059e+37
    %v801 = vand.u32 %v789, 2147483648
    %v802 = vor.u32 1.1754944e-38, %v801
    %v803 = vsel %vm800, %v802, %v798
    %v804 = vmul.f32 1.0, %v803
    %v805 = vtanh.pop %v785
    %v806 = vmul.f32 %v804, %v688
    %808 = vrot.lane.b32.xlu0 %v805, 64
    %v809 = vpop.permute.xlu0 %808
    %v811 = vmul.f32 %v804, %v809
    %813 = vrot.lane.b32.xlu0 %v811, 32
    %v814 = vpop.permute.xlu0 %813
    %v816 = vadd.f32 %v806, %v814
    %v817 = vtanh.pop %v816
    %819 = vrot.lane.b32.xlu0 %v817, 64
    %v820 = vpop.permute.xlu0 %819
    %v822 = vmul.f32 %v804, %v820
    %824 = vrot.lane.b32.xlu0 %v784, 32
    %v825 = vpop.permute.xlu0 %824
    %828 = vrot.lane.b32.xlu0 %v822, 64
    %v829 = vpop.permute.xlu0 %828
    %v831 = vsel %vm186, %v825, %v829
    %v833 = vsel %vm188, %v831, 0
    %835 = vmatpush.msra.mxu0 0.0
    %836 = vmatpush.msra.mxu0 0.0
    %837 = vmatpush.msra.mxu0 0.0
    %838 = vmatpush.msra.mxu0 0.0
    %839 = vmatpush.msra.mxu0 0.0
    %840 = vmatpush.msra.mxu0 0.0
    %841 = vmatpush.msra.mxu0 0.0
    %842 = vmatpush.msra.mxu0 0.0
    %843 = vmatpush.msra.mxu0 %v142
    %844 = vmatpush.msra.mxu0 %v140
    %845 = vmatpush.msra.mxu0 %v138
    %846 = vmatpush.msra.mxu0 %v136
    %847 = vmatpush.msra.mxu0 %v134
    %848 = vmatpush.msra.mxu0 %v132
    %849 = vmatpush.msra.mxu0 %v130
    %850 = vmatpush.msra.mxu0 %v128
    %851 = vmatmul.f32.gmra.mxu0 %v833
    %v852 = vpop.f32.mrf.mxu0
    %v853 = vadd.f32 0.0, %v852
    %854 = vdwg.mxu0
    %855 = vmatpush.msra.mxu0 0.0
    %856 = vmatpush.msra.mxu0 0.0
    %857 = vmatpush.msra.mxu0 0.0
    %858 = vmatpush.msra.mxu0 0.0
    %859 = vmatpush.msra.mxu0 0.0
    %860 = vmatpush.msra.mxu0 0.0
    %861 = vmatpush.msra.mxu0 0.0
    %862 = vmatpush.msra.mxu0 0.0
    %863 = vmatpush.msra.mxu0 %v143
    %864 = vmatpush.msra.mxu0 %v141
    %865 = vmatpush.msra.mxu0 %v139
    %866 = vmatpush.msra.mxu0 %v137
    %867 = vmatpush.msra.mxu0 %v135
    %868 = vmatpush.msra.mxu0 %v133
    %869 = vmatpush.msra.mxu0 %v131
    %870 = vmatpush.msra.mxu0 %v129
    %871 = vmatmul.f32.gmra.mxu0 %v833
    %v872 = vpop.f32.mrf.mxu0
    %v873 = vadd.f32 0.0, %v872
    %874 = vdwg.mxu0
    %v875 = vadd.f32 %v122, %v853
    %v876 = vxor.u32 %v875, 2147483648
    %v877 = vmul.f32 %v876, 1.442695
    %v878 = vpow.pop %v877
    %v879 = vadd.f32 %v878, 1.0
    %v880 = vrcp.pop %v879
    %v881 = vmul.f32 %v879, %v880
    %v882 = vsub.f32 1.0, %v881
    %v883 = vmul.f32 %v880, %v882
    %v884 = vadd.f32 %v880, %v883
    %vm885 = vweird.f32 %v879
    %vm886 = vweird.f32 %v880
    %vm887 = vmor %vm885, %vm886
    %v888 = vsel %vm887, %v880, %v884
    %v889 = vand.u32 2147483647, %v879
    %vm890 = vcmp.eq.f32.partialorder %v889, 8.507059e+37
    %v891 = vand.u32 %v879, 2147483648
    %v892 = vor.u32 1.1754944e-38, %v891
    %v893 = vsel %vm890, %v892, %v888
    %v894 = vmul.f32 1.0, %v893
    %v895 = vtanh.pop %v875
    %v896 = vmul.f32 %v894, %v778
    %898 = vrot.lane.b32.xlu0 %v895, 64
    %v899 = vpop.permute.xlu0 %898
    %v901 = vmul.f32 %v894, %v899
    %903 = vrot.lane.b32.xlu0 %v901, 32
    %v904 = vpop.permute.xlu0 %903
    %v906 = vadd.f32 %v896, %v904
    %v907 = vtanh.pop %v906
    %909 = vrot.lane.b32.xlu0 %v907, 64
    %v910 = vpop.permute.xlu0 %909
    %v912 = vmul.f32 %v894, %v910
    %v913 = vadd.f32 %v873, %v271
    %v914 = vxor.u32 %v913, 2147483648
    %v915 = vmul.f32 %v914, 1.442695
    %v916 = vpow.pop %v915
    %v917 = vadd.f32 %v916, 1.0
    %v918 = vrcp.pop %v917
    %v919 = vmul.f32 %v917, %v918
    %v920 = vsub.f32 1.0, %v919
    %v921 = vmul.f32 %v918, %v920
    %v922 = vadd.f32 %v918, %v921
    %vm923 = vweird.f32 %v917
    %vm924 = vweird.f32 %v918
    %vm925 = vmor %vm923, %vm924
    %v926 = vsel %vm925, %v918, %v922
    %v927 = vand.u32 2147483647, %v917
    %vm928 = vcmp.eq.f32.partialorder %v927, 8.507059e+37
    %v929 = vand.u32 %v917, 2147483648
    %v930 = vor.u32 1.1754944e-38, %v929
    %v931 = vsel %vm928, %v930, %v926
    %v932 = vmul.f32 1.0, %v931
    %v933 = vtanh.pop %v913
    %v934 = vmul.f32 %v932, %v816
    %936 = vrot.lane.b32.xlu0 %v933, 64
    %v937 = vpop.permute.xlu0 %936
    %v939 = vmul.f32 %v932, %v937
    %941 = vrot.lane.b32.xlu0 %v939, 32
    %v942 = vpop.permute.xlu0 %941
    %v944 = vadd.f32 %v934, %v942
    %v945 = vtanh.pop %v944
    %947 = vrot.lane.b32.xlu0 %v945, 64
    %v948 = vpop.permute.xlu0 %947
    %v950 = vmul.f32 %v932, %v948
    %952 = vrot.lane.b32.xlu0 %v912, 32
    %v953 = vpop.permute.xlu0 %952
    %956 = vrot.lane.b32.xlu0 %v950, 64
    %v957 = vpop.permute.xlu0 %956
    %v959 = vsel %vm186, %v953, %v957
    %v961 = vsel %vm188, %v959, 0
    %963 = vmatpush.msra.mxu0 0.0
    %964 = vmatpush.msra.mxu0 0.0
    %965 = vmatpush.msra.mxu0 0.0
    %966 = vmatpush.msra.mxu0 0.0
    %967 = vmatpush.msra.mxu0 0.0
    %968 = vmatpush.msra.mxu0 0.0
    %969 = vmatpush.msra.mxu0 0.0
    %970 = vmatpush.msra.mxu0 0.0
    %971 = vmatpush.msra.mxu0 %v142
    %972 = vmatpush.msra.mxu0 %v140
    %973 = vmatpush.msra.mxu0 %v138
    %974 = vmatpush.msra.mxu0 %v136
    %975 = vmatpush.msra.mxu0 %v134
    %976 = vmatpush.msra.mxu0 %v132
    %977 = vmatpush.msra.mxu0 %v130
    %978 = vmatpush.msra.mxu0 %v128
    %979 = vmatmul.f32.gmra.mxu0 %v961
    %v980 = vpop.f32.mrf.mxu0
    %v981 = vadd.f32 0.0, %v980
    %982 = vdwg.mxu0
    %983 = vmatpush.msra.mxu0 0.0
    %984 = vmatpush.msra.mxu0 0.0
    %985 = vmatpush.msra.mxu0 0.0
    %986 = vmatpush.msra.mxu0 0.0
    %987 = vmatpush.msra.mxu0 0.0
    %988 = vmatpush.msra.mxu0 0.0
    %989 = vmatpush.msra.mxu0 0.0
    %990 = vmatpush.msra.mxu0 0.0
    %991 = vmatpush.msra.mxu0 %v143
    %992 = vmatpush.msra.mxu0 %v141
    %993 = vmatpush.msra.mxu0 %v139
    %994 = vmatpush.msra.mxu0 %v137
    %995 = vmatpush.msra.mxu0 %v135
    %996 = vmatpush.msra.mxu0 %v133
    %997 = vmatpush.msra.mxu0 %v131
    %998 = vmatpush.msra.mxu0 %v129
    %999 = vmatmul.f32.gmra.mxu0 %v961
    %v1000 = vpop.f32.mrf.mxu0
    %v1001 = vadd.f32 0.0, %v1000
    %1002 = vdwg.mxu0
    %v1003 = vadd.f32 %v127, %v981
    %v1004 = vxor.u32 %v1003, 2147483648
    %v1005 = vmul.f32 %v1004, 1.442695
    %v1006 = vpow.pop %v1005
    %v1007 = vadd.f32 %v1006, 1.0
    %v1008 = vrcp.pop %v1007
    %v1009 = vmul.f32 %v1007, %v1008
    %v1010 = vsub.f32 1.0, %v1009
    %v1011 = vmul.f32 %v1008, %v1010
    %v1012 = vadd.f32 %v1008, %v1011
    %vm1013 = vweird.f32 %v1007
    %vm1014 = vweird.f32 %v1008
    %vm1015 = vmor %vm1013, %vm1014
    %v1016 = vsel %vm1015, %v1008, %v1012
    %v1017 = vand.u32 2147483647, %v1007
    %vm1018 = vcmp.eq.f32.partialorder %v1017, 8.507059e+37
    %v1019 = vand.u32 %v1007, 2147483648
    %v1020 = vor.u32 1.1754944e-38, %v1019
    %v1021 = vsel %vm1018, %v1020, %v1016
    %v1022 = vmul.f32 1.0, %v1021
    %v1023 = vtanh.pop %v1003
    %v1024 = vmul.f32 %v1022, %v906
    %1026 = vrot.lane.b32.xlu0 %v1023, 64
    %v1027 = vpop.permute.xlu0 %1026
    %v1029 = vmul.f32 %v1022, %v1027
    %1031 = vrot.lane.b32.xlu0 %v1029, 32
    %v1032 = vpop.permute.xlu0 %1031
    %v1034 = vadd.f32 %v1024, %v1032
    %v1035 = vtanh.pop %v1034
    %1037 = vrot.lane.b32.xlu0 %v1035, 64
    %v1038 = vpop.permute.xlu0 %1037
    %v1040 = vmul.f32 %v1022, %v1038
    %v1041 = vadd.f32 %v1001, %v271
    %v1042 = vxor.u32 %v1041, 2147483648
    %v1043 = vmul.f32 %v1042, 1.442695
    %v1044 = vpow.pop %v1043
    %v1045 = vadd.f32 %v1044, 1.0
    %v1046 = vrcp.pop %v1045
    %v1047 = vmul.f32 %v1045, %v1046
    %v1048 = vsub.f32 1.0, %v1047
    %v1049 = vmul.f32 %v1046, %v1048
    %v1050 = vadd.f32 %v1046, %v1049
    %vm1051 = vweird.f32 %v1045
    %vm1052 = vweird.f32 %v1046
    %vm1053 = vmor %vm1051, %vm1052
    %v1054 = vsel %vm1053, %v1046, %v1050
    %v1055 = vand.u32 2147483647, %v1045
    %vm1056 = vcmp.eq.f32.partialorder %v1055, 8.507059e+37
    %v1057 = vand.u32 %v1045, 2147483648
    %v1058 = vor.u32 1.1754944e-38, %v1057
    %v1059 = vsel %vm1056, %v1058, %v1054
    %v1060 = vmul.f32 1.0, %v1059
    %v1061 = vtanh.pop %v1041
    %v1062 = vmul.f32 %v1060, %v944
    %1064 = vrot.lane.b32.xlu0 %v1061, 64
    %v1065 = vpop.permute.xlu0 %1064
    %v1067 = vmul.f32 %v1060, %v1065
    %1069 = vrot.lane.b32.xlu0 %v1067, 32
    %v1070 = vpop.permute.xlu0 %1069
    %v1072 = vadd.f32 %v1062, %v1070
    %v1073 = vtanh.pop %v1072
    %1075 = vrot.lane.b32.xlu0 %v1073, 64
    %v1076 = vpop.permute.xlu0 %1075
    %v1078 = vmul.f32 %v1060, %v1076
    %1080 = vrot.lane.b32.xlu0 %v1040, 32
    %v1081 = vpop.permute.xlu0 %1080
    %1084 = vrot.lane.b32.xlu0 %v1078, 64
    %v1085 = vpop.permute.xlu0 %1084
    %v1087 = vsel %vm186, %v1081, %v1085
    %v1089 = vsel %vm188, %v1087, 0
    %1091 = vmatpush.msra.mxu0 0.0
    %1092 = vmatpush.msra.mxu0 0.0
    %1093 = vmatpush.msra.mxu0 0.0
    %1094 = vmatpush.msra.mxu0 0.0
    %1095 = vmatpush.msra.mxu0 0.0
    %1096 = vmatpush.msra.mxu0 0.0
    %1097 = vmatpush.msra.mxu0 0.0
    %1098 = vmatpush.msra.mxu0 0.0
    %1099 = vmatpush.msra.mxu0 %v143
    %1100 = vmatpush.msra.mxu0 %v141
    %1101 = vmatpush.msra.mxu0 %v139
    %1102 = vmatpush.msra.mxu0 %v137
    %1103 = vmatpush.msra.mxu0 %v135
    %1104 = vmatpush.msra.mxu0 %v133
    %1105 = vmatpush.msra.mxu0 %v131
    %1106 = vmatpush.msra.mxu0 %v129
    %1107 = vmatmul.f32.gmra.mxu0 %v1089
    %v1108 = vpop.f32.mrf.mxu0
    %v1109 = vadd.f32 0.0, %v1108
    %1110 = vdwg.mxu0
    %v1111 = vadd.f32 %v1109, %v271
    %v1112 = vxor.u32 %v1111, 2147483648
    %v1113 = vmul.f32 %v1112, 1.442695
    %v1114 = vpow.pop %v1113
    %v1115 = vadd.f32 %v1114, 1.0
    %v1116 = vrcp.pop %v1115
    %v1117 = vmul.f32 %v1115, %v1116
    %v1118 = vsub.f32 1.0, %v1117
    %v1119 = vmul.f32 %v1116, %v1118
    %v1120 = vadd.f32 %v1116, %v1119
    %vm1121 = vweird.f32 %v1115
    %vm1122 = vweird.f32 %v1116
    %vm1123 = vmor %vm1121, %vm1122
    %v1124 = vsel %vm1123, %v1116, %v1120
    %v1125 = vand.u32 2147483647, %v1115
    %vm1126 = vcmp.eq.f32.partialorder %v1125, 8.507059e+37
    %v1127 = vand.u32 %v1115, 2147483648
    %v1128 = vor.u32 1.1754944e-38, %v1127
    %v1129 = vsel %vm1126, %v1128, %v1124
    %v1130 = vmul.f32 1.0, %v1129
    %v1131 = vtanh.pop %v1111
    %v1132 = vmul.f32 %v1130, %v1072
    %1134 = vrot.lane.b32.xlu0 %v1131, 64
    %v1135 = vpop.permute.xlu0 %1134
    %v1137 = vmul.f32 %v1130, %v1135
    %1139 = vrot.lane.b32.xlu0 %v1137, 32
    %v1140 = vpop.permute.xlu0 %1139
    %v1142 = vadd.f32 %v1132, %v1140
    %v1143 = vtanh.pop %v1142
    %1145 = vrot.lane.b32.xlu0 %v1143, 64
    %v1146 = vpop.permute.xlu0 %1145
    %v1148 = vmul.f32 %v1130, %v1146
    %1149 = vrot.lane.b32.xlu0 %v310, 32
    %v1150 = vpop.permute.xlu0 %1149
    %1152 = vrot.lane.b32.xlu0 %v566, 96
    %v1153 = vpop.permute.xlu0 %1152
    %1155 = vrot.lane.b32.xlu0 %v822, 32
    %v1156 = vpop.permute.xlu0 %1155
    %1158 = vrot.lane.b32.xlu0 %v1078, 96
    %v1159 = vpop.permute.xlu0 %1158
    %v1161 = vsel %vm186, %v1150, %v445
    %v1162 = vsel %vm188, %v1161, %v1153
    %vm1163 = vcmask 785408
    %v1164 = vsel %vm1163, %v1162, %v694
    %v1165 = vsel %vm186, %v1156, %v957
    %v1166 = vsel %vm188, %v1165, %v1159
    %v1167 = vsel %vm1163, %v1166, %v1148
    %v1168 = vld [vmem:[%s5] sm:$0xff]
    %v1169 = vld [vmem:[%s5 + $0x8] sm:$0xff]
    %v1170 = vld [vmem:[%s5 + $0x10] sm:$0xff]
    %v1171 = vld [vmem:[%s5 + $0x18] sm:$0xff]
    %v1172 = vld [vmem:[%s5 + $0x20] sm:$0xff]
    %v1173 = vld [vmem:[%s5 + $0x28] sm:$0xff]
    %v1174 = vld [vmem:[%s5 + $0x30] sm:$0xff]
    %v1175 = vld [vmem:[%s5 + $0x38] sm:$0xff]
    %v1176 = vld [vmem:[%s5 + $0x40] sm:$0xff]
    %v1177 = vld [vmem:[%s5 + $0x48] sm:$0xff]
    %v1178 = vld [vmem:[%s5 + $0x50] sm:$0xff]
    %v1179 = vld [vmem:[%s5 + $0x58] sm:$0xff]
    %v1180 = vld [vmem:[%s5 + $0x60] sm:$0xff]
    %v1181 = vld [vmem:[%s5 + $0x68] sm:$0xff]
    %v1182 = vld [vmem:[%s5 + $0x70] sm:$0xff]
    %v1183 = vld [vmem:[%s5 + $0x78] sm:$0xff]
    %v1184 = vld [vmem:[%s5 + $0x80] sm:$0xff]
    %v1185 = vld [vmem:[%s5 + $0x88] sm:$0xff]
    %v1186 = vld [vmem:[%s5 + $0x90] sm:$0xff]
    %v1187 = vld [vmem:[%s5 + $0x98] sm:$0xff]
    %v1188 = vld [vmem:[%s5 + $0xa0] sm:$0xff]
    %v1189 = vld [vmem:[%s5 + $0xa8] sm:$0xff]
    %v1190 = vld [vmem:[%s5 + $0xb0] sm:$0xff]
    %v1191 = vld [vmem:[%s5 + $0xb8] sm:$0xff]
    %v1192 = vld [vmem:[%s5 + $0xc0] sm:$0xff]
    %v1193 = vld [vmem:[%s5 + $0xc8] sm:$0xff]
    %v1194 = vld [vmem:[%s5 + $0xd0] sm:$0xff]
    %v1195 = vld [vmem:[%s5 + $0xd8] sm:$0xff]
    %v1196 = vld [vmem:[%s5 + $0xe0] sm:$0xff]
    %v1197 = vld [vmem:[%s5 + $0xe8] sm:$0xff]
    %v1198 = vld [vmem:[%s5 + $0xf0] sm:$0xff]
    %v1199 = vld [vmem:[%s5 + $0xf8] sm:$0xff]
    %v1200 = vld [vmem:[%s6] sm:$0x1]
    %v1202 = vperm.slane %v1200, 0
    %1204 = vmatpush.msra.mxu0 %v1183
    %1205 = vmatpush.msra.mxu0 %v1182
    %1206 = vmatpush.msra.mxu0 %v1181
    %1207 = vmatpush.msra.mxu0 %v1180
    %1208 = vmatpush.msra.mxu0 %v1179
    %1209 = vmatpush.msra.mxu0 %v1178
    %1210 = vmatpush.msra.mxu0 %v1177
    %1211 = vmatpush.msra.mxu0 %v1176
    %1212 = vmatpush.msra.mxu0 %v1175
    %1213 = vmatpush.msra.mxu0 %v1174
    %1214 = vmatpush.msra.mxu0 %v1173
    %1215 = vmatpush.msra.mxu0 %v1172
    %1216 = vmatpush.msra.mxu0 %v1171
    %1217 = vmatpush.msra.mxu0 %v1170
    %1218 = vmatpush.msra.mxu0 %v1169
    %1219 = vmatpush.msra.mxu0 %v1168
    %1220 = vmatmul.f32.gmra.mxu0 %v1164
    %v1221 = vpop.f32.mrf.mxu0
    %v1222 = vadd.f32 %v1202, %v1221
    %1223 = vdwg.mxu0
    %1224 = vmatpush.msra.mxu0 %v1199
    %1225 = vmatpush.msra.mxu0 %v1198
    %1226 = vmatpush.msra.mxu0 %v1197
    %1227 = vmatpush.msra.mxu0 %v1196
    %1228 = vmatpush.msra.mxu0 %v1195
    %1229 = vmatpush.msra.mxu0 %v1194
    %1230 = vmatpush.msra.mxu0 %v1193
    %1231 = vmatpush.msra.mxu0 %v1192
    %1232 = vmatpush.msra.mxu0 %v1191
    %1233 = vmatpush.msra.mxu0 %v1190
    %1234 = vmatpush.msra.mxu0 %v1189
    %1235 = vmatpush.msra.mxu0 %v1188
    %1236 = vmatpush.msra.mxu0 %v1187
    %1237 = vmatpush.msra.mxu0 %v1186
    %1238 = vmatpush.msra.mxu0 %v1185
    %1239 = vmatpush.msra.mxu0 %v1184
    %1240 = vmatmul.f32.gmra.mxu0 %v1167
    %v1241 = vpop.f32.mrf.mxu0
    %v1242 = vadd.f32 %v1222, %v1241
    %1243 = vdwg.mxu0
    %vm1244 = vcmask 279552
    %1245 = vst.msk [vmem:[#allocation2] sm:$0x3] %vm1244, %v1242
    // Predicated region
    $region30: #{lstm_model_forward.1} parent=1 // pred_check
      _
    $region31: #{lstm_model_forward.1} parent=1 // pred_check_branch
      %1247 = sbr.rel (0) target = $region33
    $region32: #{lstm_model_forward.1} parent=1 // pred_region
      %1249 = vsyncadd [#allocation3], 0
      %s1251 = sshll.u32 [#allocation2], 4
      %s1252 = int_to_ptr.vmem [resolvable:$true] %s1251
      %s1253 = sshll.u32 %s7, 4
      %s1254 = int_to_ptr.hbm [resolvable:$true] %s1253
      %1256 = dma.vmem_to_hbm [thread:$0]  %s1252, 32, %s1254, [#allocation3]
    $region33: #{lstm_model_forward.1} parent=1 // pred_fallthru
      _
    // Predicated region
    $region34: #{lstm_model_forward.1} parent=1 // pred_check
      _
    $region35: #{lstm_model_forward.1} parent=1 // pred_check_branch
      %1258 = sbr.rel (0) target = $region37
    $region36: #{lstm_model_forward.1} parent=1 // pred_region
      %1260 = dma.done [#allocation3], 32
    $region37: #{lstm_model_forward.1} parent=1 // pred_fallthru
      _
    %1261 = vsyncpa [#allocation3], 1

</llo_original>
